<compile_context>
chip_gen: v7x
topology: tpu7x:2x2x1
jax: 0.10.0
libtpu: 0.0.40
codegen_flags: <defaults>
</compile_context>

<pallas_src>
import functools

import numpy as np
import jax
import jax.numpy as jnp
from jax import lax
from jax.experimental import pallas as pl
from jax.experimental.pallas import tpu as pltpu

K_EPS = 1e-8   # kEpsilon used by pytorch3d barycentric_coordinates / zero-area test
Z_BIG = 1e10   # background z-buffer value


# --------------------------------------------------------------------------
# Kernel: one grid step == (batch element n, pixel tile t)
# --------------------------------------------------------------------------
def _rasterize_interp_kernel(coef_ref, out_ref, *, F, D, H, W):
    """
    coef_ref : SMEM (N*F*(4+D)*3,) f32  flat per-face affine coefficient table
               layout per face: [w0:(A,B,C), w1:(A,B,C), w2:(A,B,C), z:(A,B,C),
                                 attr_0:(A,B,C), ..., attr_{D-1}:(A,B,C)]
    out_ref  : VMEM (1, D+1, tsub, 128) f32
    """
    n = pl.program_id(0)
    t = pl.program_id(1)
    C = 3 * (4 + D)
    tsub = out_ref.shape[2]

    # ---- pixel-center NDC coordinates generated in-kernel (lane-dense) ----
    # flattened pixel index of element (r, c) in this tile
    ridx = lax.broadcasted_iota(jnp.int32, (tsub, 128), 0)
    cidx = lax.broadcasted_iota(jnp.int32, (tsub, 128), 1)
    idx = (t * (tsub * 128) + ridx * 128 + cidx).astype(jnp.float32)
    # idx < 2^24 so the f32 div/mod below is exact (0.5 guard vs rounding)
    yi = jnp.floor((idx + 0.5) * (1.0 / W))
    xi = idx - yi * W
    xf = (2.0 * (W - 1.0 - xi) + 1.0) / W - 1.0
    yf = (2.0 * (H - 1.0 - yi) + 1.0) / H - 1.0

    nFC = n * (F * C)   # hoisted: per-face base is a single multiply-add

    zbuf0 = jnp.full((tsub, 128), Z_BIG, jnp.float32)
    outs0 = tuple(jnp.zeros((tsub, 128), jnp.float32) for _ in range(D))

    def body(f, carry):
        zbuf, outs = carry
        base = nFC + f * C

        def affine(q):
            a = coef_ref[base + 3 * q]
            b = coef_ref[base + 3 * q + 1]
            c = coef_ref[base + 3 * q + 2]
            return (a * xf + b * yf) + c

        w0 = affine(0)
        w1 = affine(1)
        w2 = affine(2)
        pz = affine(3)

        # blur_radius == 0 -> strictly inside; degenerate faces are encoded so
        # that w0 == -1 everywhere and can never win.
        win = (w0 > 0.0) & (w1 > 0.0) & (w2 > 0.0) & (pz >= 0.0) & (pz < zbuf)

        new_zbuf = jnp.where(win, pz, zbuf)
        new_outs = tuple(jnp.where(win, affine(4 + d), outs[d]) for d in range(D))
        return new_zbuf, new_outs

    # tiny F: fully unroll; small tile: unroll=4 to hide scalar loads; else 2.
    unroll = F if F <= 8 else (4 if tsub <= 16 else 2)
    zbuf, outs = lax.fori_loop(0, F, body, (zbuf0, outs0), unroll=unroll)

    for d in range(D):
        out_ref[0, d, :, :] = outs[d]
    out_ref[0, D, :, :] = jnp.where(zbuf < Z_BIG, 1.0, 0.0).astype(jnp.float32)


# --------------------------------------------------------------------------
# Wrapper glue (plain JAX): sign flip, gather, affine-coefficient baking
# --------------------------------------------------------------------------
def _build_face_coefficients(vertices, faces, attributes):
    """Per-face affine coefficients (A, B, C): quantity(pixel) = A*xf + B*yf + C."""
    N, F, _ = faces.shape
    D = attributes.shape[-1]

    fixed = vertices.astype(jnp.float32)
    fixed = fixed.at[..., :2].multiply(-1.0)                           # pytorch3d NDC flip
    fv = jax.vmap(lambda v, f: v[f])(fixed, faces.astype(jnp.int32))   # (N, F, 3, 3)

    x0, y0, z0 = fv[:, :, 0, 0], fv[:, :, 0, 1], fv[:, :, 0, 2]
    x1, y1, z1 = fv[:, :, 1, 0], fv[:, :, 1, 1], fv[:, :, 1, 2]
    x2, y2, z2 = fv[:, :, 2, 0], fv[:, :, 2, 1], fv[:, :, 2, 2]

    area_raw = (x2 - x0) * (y1 - y0) - (y2 - y0) * (x1 - x0)
    inv_area = 1.0 / (area_raw + K_EPS)

    # w0 = ((xf-x1)(y2-y1) - (yf-y1)(x2-x1)) / (area+eps), expanded in xf, yf
    A0 = (y2 - y1) * inv_area
    B0 = -(x2 - x1) * inv_area
    C0 = (y1 * (x2 - x1) - x1 * (y2 - y1)) * inv_area
    A1 = (y0 - y2) * inv_area
    B1 = -(x0 - x2) * inv_area
    C1 = (y2 * (x0 - x2) - x2 * (y0 - y2)) * inv_area
    A2 = (y1 - y0) * inv_area
    B2 = -(x1 - x0) * inv_area
    C2 = (y0 * (x1 - x0) - x0 * (y1 - y0)) * inv_area

    # pz = w0*z0 + w1*z1 + w2*z2
    Az = A0 * z0 + A1 * z1 + A2 * z2
    Bz = B0 * z0 + B1 * z1 + B2 * z2
    Cz = C0 * z0 + C1 * z1 + C2 * z2

    # interp_d = w0*a0d + w1*a1d + w2*a2d
    attrs = attributes.astype(jnp.float32)                             # (N, F, 3, D)
    a0, a1, a2 = attrs[:, :, 0, :], attrs[:, :, 1, :], attrs[:, :, 2, :]
    Aa = A0[..., None] * a0 + A1[..., None] * a1 + A2[..., None] * a2  # (N, F, D)
    Ba = B0[..., None] * a0 + B1[..., None] * a1 + B2[..., None] * a2
    Ca = C0[..., None] * a0 + C1[..., None] * a1 + C2[..., None] * a2

    w_coef = jnp.stack(
        [jnp.stack([A0, B0, C0], -1),
         jnp.stack([A1, B1, C1], -1),
         jnp.stack([A2, B2, C2], -1),
         jnp.stack([Az, Bz, Cz], -1)], axis=2)                         # (N, F, 4, 3)
    a_coef = jnp.stack([Aa, Ba, Ca], axis=-1)                          # (N, F, D, 3)
    coef = jnp.concatenate([w_coef, a_coef], axis=2)                   # (N, F, 4+D, 3)

    # zero-area faces never win: w0 := -1 everywhere, everything else zeroed.
    degen = jnp.abs(area_raw) <= K_EPS                                 # (N, F)
    never = jnp.zeros_like(coef).at[:, :, 0, 2].set(-1.0)
    coef = jnp.where(degen[:, :, None, None], never, coef)

    return coef.reshape(N * F * (4 + D) * 3)


def _choose_tsub(rows, D):
    """Largest tile height (multiple of 8) that keeps carries register-resident."""
    cap = (384 // (D + 3)) // 8 * 8          # (D+3)*tsub/8 vregs <= ~48
    cap = max(8, min(256, cap))
    if rows <= cap:
        return max(8, -(-rows // 8) * 8)     # never below 8 sublanes
    return cap


def pytorch3d_rasterizer_forward(vertices, faces, attributes, image_size=16):
    """Equivalent of Pytorch3dRasterizer(image_size).forward(vertices, faces, attributes).

    vertices   : (N, V, 3) float
    faces      : (N, F, 3) int
    attributes : (N, F, 3, D) float
    returns    : (N, D+1, H, W) float32  (interpolated attrs + visibility mask)
    """
    N = vertices.shape[0]
    F = faces.shape[1]
    D = attributes.shape[-1]
    H = W = int(image_size)
    P = H * W

    coef = _build_face_coefficients(vertices, faces, attributes)

    # Flattened pixel domain, tiled lane-dense as (tsub, 128) blocks.
    rows = -(-P // 128)
    tsub = _choose_tsub(rows, D)
    rows_pad = -(-rows // tsub) * tsub
    p_pad = rows_pad * 128
    num_tiles = rows_pad // tsub

    kernel = functools.partial(_rasterize_interp_kernel, F=F, D=D, H=H, W=W)
    out = pl.pallas_call(
        kernel,
        out_shape=jax.ShapeDtypeStruct((N, D + 1, rows_pad, 128), jnp.float32),
        grid=(N, num_tiles),
        in_specs=[
            pl.BlockSpec(memory_space=pltpu.MemorySpace.SMEM),   # flat coefficient table
        ],
        out_specs=pl.BlockSpec((1, D + 1, tsub, 128), lambda n, t: (n, 0, t, 0)),
        compiler_params=pltpu.CompilerParams(
            dimension_semantics=("parallel", "parallel")),
    )(coef)

    # Padded pixels (beyond P) are garbage by construction; slice them off.
    out = out.reshape(N, D + 1, p_pad)[:, :, :P].reshape(N, D + 1, H, W)
    return out


# ----------------------- pure numpy reference (for checking) -----------------------
def _reference_forward(vertices, faces, attributes, image_size):
    vertices = np.asarray(vertices, np.float32)
    faces = np.asarray(faces)
    attributes = np.asarray(attributes, np.float32)
    N = vertices.shape[0]
    F = faces.shape[1]
    D = attributes.shape[-1]
    H = W = int(image_size)
    fixed = vertices.copy()
    fixed[..., :2] *= -1.0
    out = np.zeros((N, D + 1, H, W), np.float32)
    for n in range(N):
        for yi in range(H):
            yfv = (2.0 * (H - 1 - yi) + 1.0) / H - 1.0
            for xi in range(W):
                xfv = (2.0 * (W - 1 - xi) + 1.0) / W - 1.0
                best_z, best = 1e10, None
                for f in range(F):
                    v0 = fixed[n, faces[n, f, 0]]
                    v1 = fixed[n, faces[n, f, 1]]
                    v2 = fixed[n, faces[n, f, 2]]
                    area_raw = (v2[0] - v0[0]) * (v1[1] - v0[1]) - (v2[1] - v0[1]) * (v1[0] - v0[0])
                    if abs(area_raw) <= K_EPS:
                        continue
                    area = area_raw + K_EPS
                    w0 = ((xfv - v1[0]) * (v2[1] - v1[1]) - (yfv - v1[1]) * (v2[0] - v1[0])) / area
                    w1 = ((xfv - v2[0]) * (v0[1] - v2[1]) - (yfv - v2[1]) * (v0[0] - v2[0])) / area
                    w2 = ((xfv - v0[0]) * (v1[1] - v0[1]) - (yfv - v0[1]) * (v1[0] - v0[0])) / area
                    if not (w0 > 0 and w1 > 0 and w2 > 0):
                        continue
                    pz = w0 * v0[2] + w1 * v1[2] + w2 * v2[2]
                    if pz < 0 or pz >= best_z:
                        continue
                    best_z, best = pz, (f, w0, w1, w2)
                if best is not None:
                    f, w0, w1, w2 = best
                    vals = w0 * attributes[n, f, 0] + w1 * attributes[n, f, 1] + w2 * attributes[n, f, 2]
                    out[n, :D, yi, xi] = vals
                    out[n, D, yi, xi] = 1.0
    return out


if __name__ == "__main__":
    # Small synthetic problem: N=2 meshes, V=8 verts, F=4 faces, D=3 attr channels,
    # image_size=16  (module default is 224; semantics are identical).
    N, V, F, D, S = 2, 8, 4, 3, 16
    key = jax.random.PRNGKey(0)
    kxy, kz, ka = jax.random.split(key, 3)

    xy = jax.random.uniform(kxy, (N, V, 2), minval=-0.9, maxval=0.9)
    z = jax.random.uniform(kz, (N, V, 1), minval=0.2, maxval=2.0)
    vertices = jnp.concatenate([xy, z], axis=-1)                      # (N, V, 3)

    faces = jnp.tile(
        jnp.array([[0, 1, 2], [2, 3, 4], [4, 5, 6], [1, 5, 7]], jnp.int32)[None],
        (N, 1, 1),
    )                                                                 # (N, F, 3)
    attributes = jax.random.normal(ka, (N, F, 3, D), jnp.float32)     # (N, F, 3, D)

    out = pytorch3d_rasterizer_forward(vertices, faces, attributes, image_size=S)
    out = jax.block_until_ready(out)

    ref = _reference_forward(vertices, faces, attributes, S)
    np.testing.assert_allclose(np.asarray(out), ref, atol=1e-3, rtol=1e-3)

    print("KERNEL_OK")
</pallas_src>

<mosaic_0001>
module attributes {stable_mosaic.version = 11 : i64} {
  func.func @_rasterize_interp_kernel(%arg0: i32, %arg1: i32, %arg2: memref<168xf32, #tpu.memory_space<smem>>, %arg3: memref<1x4x8x128xf32, #tpu.memory_space<vmem>>) attributes {dimension_semantics = [#tpu.dimension_semantics<parallel>, #tpu.dimension_semantics<parallel>], iteration_bounds = array<i64: 2, 1>, scalar_prefetch = 0 : i64, scratch_operands = 0 : i64, tpu.core_type = #tpu.core_type<tc>, window_params = [{transform_indices = @transform_0, window_bounds = array<i64: 168>}, {transform_indices = @transform_1, window_bounds = array<i64: 1, 4, 8, 128>}]} {
    %0 = tpu.iota {dimensions = array<i32: 0>} : vector<8x128xi32>
    %1 = tpu.iota {dimensions = array<i32: 1>} : vector<8x128xi32>
    %c1024_i32 = arith.constant 1024 : i32
    %2 = arith.muli %arg1, %c1024_i32 : i32
    %c128_i32 = arith.constant 128 : i32
    %3 = vector.broadcast %c128_i32 : i32 to vector<8x128xi32>
    %4 = arith.muli %0, %3 : vector<8x128xi32>
    %5 = vector.broadcast %2 : i32 to vector<8x128xi32>
    %6 = arith.addi %5, %4 : vector<8x128xi32>
    %7 = arith.addi %6, %1 : vector<8x128xi32>
    %8 = arith.sitofp %7 : vector<8x128xi32> to vector<8x128xf32>
    %cst = arith.constant 5.000000e-01 : f32
    %9 = vector.broadcast %cst : f32 to vector<8x128xf32>
    %10 = arith.addf %8, %9 : vector<8x128xf32>
    %cst_0 = arith.constant 6.250000e-02 : f32
    %11 = vector.broadcast %cst_0 : f32 to vector<8x128xf32>
    %12 = arith.mulf %10, %11 : vector<8x128xf32>
    %13 = math.floor %12 : vector<8x128xf32>
    %cst_1 = arith.constant 1.600000e+01 : f32
    %14 = vector.broadcast %cst_1 : f32 to vector<8x128xf32>
    %15 = arith.mulf %13, %14 : vector<8x128xf32>
    %16 = arith.subf %8, %15 : vector<8x128xf32>
    %cst_2 = arith.constant 1.500000e+01 : f32
    %17 = vector.broadcast %cst_2 : f32 to vector<8x128xf32>
    %18 = arith.subf %17, %16 : vector<8x128xf32>
    %cst_3 = arith.constant 2.000000e+00 : f32
    %19 = vector.broadcast %cst_3 : f32 to vector<8x128xf32>
    %20 = arith.mulf %19, %18 : vector<8x128xf32>
    %cst_4 = arith.constant 1.000000e+00 : f32
    %21 = vector.broadcast %cst_4 : f32 to vector<8x128xf32>
    %22 = arith.addf %20, %21 : vector<8x128xf32>
    %cst_5 = arith.constant 1.600000e+01 : f32
    %23 = vector.broadcast %cst_5 : f32 to vector<8x128xf32>
    %24 = arith.divf %22, %23 : vector<8x128xf32>
    %cst_6 = arith.constant 1.000000e+00 : f32
    %25 = vector.broadcast %cst_6 : f32 to vector<8x128xf32>
    %26 = arith.subf %24, %25 : vector<8x128xf32>
    %cst_7 = arith.constant 1.500000e+01 : f32
    %27 = vector.broadcast %cst_7 : f32 to vector<8x128xf32>
    %28 = arith.subf %27, %13 : vector<8x128xf32>
    %cst_8 = arith.constant 2.000000e+00 : f32
    %29 = vector.broadcast %cst_8 : f32 to vector<8x128xf32>
    %30 = arith.mulf %29, %28 : vector<8x128xf32>
    %cst_9 = arith.constant 1.000000e+00 : f32
    %31 = vector.broadcast %cst_9 : f32 to vector<8x128xf32>
    %32 = arith.addf %30, %31 : vector<8x128xf32>
    %cst_10 = arith.constant 1.600000e+01 : f32
    %33 = vector.broadcast %cst_10 : f32 to vector<8x128xf32>
    %34 = arith.divf %32, %33 : vector<8x128xf32>
    %cst_11 = arith.constant 1.000000e+00 : f32
    %35 = vector.broadcast %cst_11 : f32 to vector<8x128xf32>
    %36 = arith.subf %34, %35 : vector<8x128xf32>
    %c84_i32 = arith.constant 84 : i32
    %37 = arith.muli %arg0, %c84_i32 : i32
    %cst_12 = arith.constant 1.000000e+10 : f32
    %38 = vector.broadcast %cst_12 : f32 to vector<8x128xf32>
    %cst_13 = arith.constant 0.000000e+00 : f32
    %39 = vector.broadcast %cst_13 : f32 to vector<8x128xf32>
    %cst_14 = arith.constant 0.000000e+00 : f32
    %40 = vector.broadcast %cst_14 : f32 to vector<8x128xf32>
    %cst_15 = arith.constant 0.000000e+00 : f32
    %41 = vector.broadcast %cst_15 : f32 to vector<8x128xf32>
    %c0_i32 = arith.constant 0 : i32
    %c21_i32 = arith.constant 21 : i32
    %42 = arith.muli %c0_i32, %c21_i32 : i32
    %43 = arith.addi %37, %42 : i32
    %c0_i32_16 = arith.constant 0 : i32
    %44 = arith.addi %43, %c0_i32_16 : i32
    %45 = arith.index_cast %44 : i32 to index
    %46 = memref.load %arg2[%45] : memref<168xf32, #tpu.memory_space<smem>>
    %c0_i32_17 = arith.constant 0 : i32
    %47 = arith.addi %43, %c0_i32_17 : i32
    %c1_i32 = arith.constant 1 : i32
    %48 = arith.addi %47, %c1_i32 : i32
    %49 = arith.index_cast %48 : i32 to index
    %50 = memref.load %arg2[%49] : memref<168xf32, #tpu.memory_space<smem>>
    %c0_i32_18 = arith.constant 0 : i32
    %51 = arith.addi %43, %c0_i32_18 : i32
    %c2_i32 = arith.constant 2 : i32
    %52 = arith.addi %51, %c2_i32 : i32
    %53 = arith.index_cast %52 : i32 to index
    %54 = memref.load %arg2[%53] : memref<168xf32, #tpu.memory_space<smem>>
    %55 = vector.broadcast %46 : f32 to vector<8x128xf32>
    %56 = arith.mulf %55, %26 : vector<8x128xf32>
    %57 = vector.broadcast %50 : f32 to vector<8x128xf32>
    %58 = arith.mulf %57, %36 : vector<8x128xf32>
    %59 = arith.addf %56, %58 : vector<8x128xf32>
    %60 = vector.broadcast %54 : f32 to vector<8x128xf32>
    %61 = arith.addf %59, %60 : vector<8x128xf32>
    %c3_i32 = arith.constant 3 : i32
    %62 = arith.addi %43, %c3_i32 : i32
    %63 = arith.index_cast %62 : i32 to index
    %64 = memref.load %arg2[%63] : memref<168xf32, #tpu.memory_space<smem>>
    %c3_i32_19 = arith.constant 3 : i32
    %65 = arith.addi %43, %c3_i32_19 : i32
    %c1_i32_20 = arith.constant 1 : i32
    %66 = arith.addi %65, %c1_i32_20 : i32
    %67 = arith.index_cast %66 : i32 to index
    %68 = memref.load %arg2[%67] : memref<168xf32, #tpu.memory_space<smem>>
    %c3_i32_21 = arith.constant 3 : i32
    %69 = arith.addi %43, %c3_i32_21 : i32
    %c2_i32_22 = arith.constant 2 : i32
    %70 = arith.addi %69, %c2_i32_22 : i32
    %71 = arith.index_cast %70 : i32 to index
    %72 = memref.load %arg2[%71] : memref<168xf32, #tpu.memory_space<smem>>
    %73 = vector.broadcast %64 : f32 to vector<8x128xf32>
    %74 = arith.mulf %73, %26 : vector<8x128xf32>
    %75 = vector.broadcast %68 : f32 to vector<8x128xf32>
    %76 = arith.mulf %75, %36 : vector<8x128xf32>
    %77 = arith.addf %74, %76 : vector<8x128xf32>
    %78 = vector.broadcast %72 : f32 to vector<8x128xf32>
    %79 = arith.addf %77, %78 : vector<8x128xf32>
    %c6_i32 = arith.constant 6 : i32
    %80 = arith.addi %43, %c6_i32 : i32
    %81 = arith.index_cast %80 : i32 to index
    %82 = memref.load %arg2[%81] : memref<168xf32, #tpu.memory_space<smem>>
    %c6_i32_23 = arith.constant 6 : i32
    %83 = arith.addi %43, %c6_i32_23 : i32
    %c1_i32_24 = arith.constant 1 : i32
    %84 = arith.addi %83, %c1_i32_24 : i32
    %85 = arith.index_cast %84 : i32 to index
    %86 = memref.load %arg2[%85] : memref<168xf32, #tpu.memory_space<smem>>
    %c6_i32_25 = arith.constant 6 : i32
    %87 = arith.addi %43, %c6_i32_25 : i32
    %c2_i32_26 = arith.constant 2 : i32
    %88 = arith.addi %87, %c2_i32_26 : i32
    %89 = arith.index_cast %88 : i32 to index
    %90 = memref.load %arg2[%89] : memref<168xf32, #tpu.memory_space<smem>>
    %91 = vector.broadcast %82 : f32 to vector<8x128xf32>
    %92 = arith.mulf %91, %26 : vector<8x128xf32>
    %93 = vector.broadcast %86 : f32 to vector<8x128xf32>
    %94 = arith.mulf %93, %36 : vector<8x128xf32>
    %95 = arith.addf %92, %94 : vector<8x128xf32>
    %96 = vector.broadcast %90 : f32 to vector<8x128xf32>
    %97 = arith.addf %95, %96 : vector<8x128xf32>
    %c9_i32 = arith.constant 9 : i32
    %98 = arith.addi %43, %c9_i32 : i32
    %99 = arith.index_cast %98 : i32 to index
    %100 = memref.load %arg2[%99] : memref<168xf32, #tpu.memory_space<smem>>
    %c9_i32_27 = arith.constant 9 : i32
    %101 = arith.addi %43, %c9_i32_27 : i32
    %c1_i32_28 = arith.constant 1 : i32
    %102 = arith.addi %101, %c1_i32_28 : i32
    %103 = arith.index_cast %102 : i32 to index
    %104 = memref.load %arg2[%103] : memref<168xf32, #tpu.memory_space<smem>>
    %c9_i32_29 = arith.constant 9 : i32
    %105 = arith.addi %43, %c9_i32_29 : i32
    %c2_i32_30 = arith.constant 2 : i32
    %106 = arith.addi %105, %c2_i32_30 : i32
    %107 = arith.index_cast %106 : i32 to index
    %108 = memref.load %arg2[%107] : memref<168xf32, #tpu.memory_space<smem>>
    %109 = vector.broadcast %100 : f32 to vector<8x128xf32>
    %110 = arith.mulf %109, %26 : vector<8x128xf32>
    %111 = vector.broadcast %104 : f32 to vector<8x128xf32>
    %112 = arith.mulf %111, %36 : vector<8x128xf32>
    %113 = arith.addf %110, %112 : vector<8x128xf32>
    %114 = vector.broadcast %108 : f32 to vector<8x128xf32>
    %115 = arith.addf %113, %114 : vector<8x128xf32>
    %cst_31 = arith.constant 0.000000e+00 : f32
    %116 = vector.broadcast %cst_31 : f32 to vector<8x128xf32>
    %117 = arith.cmpf ogt, %61, %116 : vector<8x128xf32>
    %cst_32 = arith.constant 0.000000e+00 : f32
    %118 = vector.broadcast %cst_32 : f32 to vector<8x128xf32>
    %119 = arith.cmpf ogt, %79, %118 : vector<8x128xf32>
    %120 = arith.andi %117, %119 : vector<8x128xi1>
    %cst_33 = arith.constant 0.000000e+00 : f32
    %121 = vector.broadcast %cst_33 : f32 to vector<8x128xf32>
    %122 = arith.cmpf ogt, %97, %121 : vector<8x128xf32>
    %123 = arith.andi %120, %122 : vector<8x128xi1>
    %cst_34 = arith.constant 0.000000e+00 : f32
    %124 = vector.broadcast %cst_34 : f32 to vector<8x128xf32>
    %125 = arith.cmpf oge, %115, %124 : vector<8x128xf32>
    %126 = arith.andi %123, %125 : vector<8x128xi1>
    %127 = arith.cmpf olt, %115, %38 : vector<8x128xf32>
    %128 = arith.andi %126, %127 : vector<8x128xi1>
    %129 = arith.select %128, %115, %38 : vector<8x128xi1>, vector<8x128xf32>
    %c12_i32 = arith.constant 12 : i32
    %130 = arith.addi %43, %c12_i32 : i32
    %131 = arith.index_cast %130 : i32 to index
    %132 = memref.load %arg2[%131] : memref<168xf32, #tpu.memory_space<smem>>
    %c12_i32_35 = arith.constant 12 : i32
    %133 = arith.addi %43, %c12_i32_35 : i32
    %c1_i32_36 = arith.constant 1 : i32
    %134 = arith.addi %133, %c1_i32_36 : i32
    %135 = arith.index_cast %134 : i32 to index
    %136 = memref.load %arg2[%135] : memref<168xf32, #tpu.memory_space<smem>>
    %c12_i32_37 = arith.constant 12 : i32
    %137 = arith.addi %43, %c12_i32_37 : i32
    %c2_i32_38 = arith.constant 2 : i32
    %138 = arith.addi %137, %c2_i32_38 : i32
    %139 = arith.index_cast %138 : i32 to index
    %140 = memref.load %arg2[%139] : memref<168xf32, #tpu.memory_space<smem>>
    %141 = vector.broadcast %132 : f32 to vector<8x128xf32>
    %142 = arith.mulf %141, %26 : vector<8x128xf32>
    %143 = vector.broadcast %136 : f32 to vector<8x128xf32>
    %144 = arith.mulf %143, %36 : vector<8x128xf32>
    %145 = arith.addf %142, %144 : vector<8x128xf32>
    %146 = vector.broadcast %140 : f32 to vector<8x128xf32>
    %147 = arith.addf %145, %146 : vector<8x128xf32>
    %148 = arith.select %128, %147, %39 : vector<8x128xi1>, vector<8x128xf32>
    %c15_i32 = arith.constant 15 : i32
    %149 = arith.addi %43, %c15_i32 : i32
    %150 = arith.index_cast %149 : i32 to index
    %151 = memref.load %arg2[%150] : memref<168xf32, #tpu.memory_space<smem>>
    %c15_i32_39 = arith.constant 15 : i32
    %152 = arith.addi %43, %c15_i32_39 : i32
    %c1_i32_40 = arith.constant 1 : i32
    %153 = arith.addi %152, %c1_i32_40 : i32
    %154 = arith.index_cast %153 : i32 to index
    %155 = memref.load %arg2[%154] : memref<168xf32, #tpu.memory_space<smem>>
    %c15_i32_41 = arith.constant 15 : i32
    %156 = arith.addi %43, %c15_i32_41 : i32
    %c2_i32_42 = arith.constant 2 : i32
    %157 = arith.addi %156, %c2_i32_42 : i32
    %158 = arith.index_cast %157 : i32 to index
    %159 = memref.load %arg2[%158] : memref<168xf32, #tpu.memory_space<smem>>
    %160 = vector.broadcast %151 : f32 to vector<8x128xf32>
    %161 = arith.mulf %160, %26 : vector<8x128xf32>
    %162 = vector.broadcast %155 : f32 to vector<8x128xf32>
    %163 = arith.mulf %162, %36 : vector<8x128xf32>
    %164 = arith.addf %161, %163 : vector<8x128xf32>
    %165 = vector.broadcast %159 : f32 to vector<8x128xf32>
    %166 = arith.addf %164, %165 : vector<8x128xf32>
    %167 = arith.select %128, %166, %40 : vector<8x128xi1>, vector<8x128xf32>
    %c18_i32 = arith.constant 18 : i32
    %168 = arith.addi %43, %c18_i32 : i32
    %169 = arith.index_cast %168 : i32 to index
    %170 = memref.load %arg2[%169] : memref<168xf32, #tpu.memory_space<smem>>
    %c18_i32_43 = arith.constant 18 : i32
    %171 = arith.addi %43, %c18_i32_43 : i32
    %c1_i32_44 = arith.constant 1 : i32
    %172 = arith.addi %171, %c1_i32_44 : i32
    %173 = arith.index_cast %172 : i32 to index
    %174 = memref.load %arg2[%173] : memref<168xf32, #tpu.memory_space<smem>>
    %c18_i32_45 = arith.constant 18 : i32
    %175 = arith.addi %43, %c18_i32_45 : i32
    %c2_i32_46 = arith.constant 2 : i32
    %176 = arith.addi %175, %c2_i32_46 : i32
    %177 = arith.index_cast %176 : i32 to index
    %178 = memref.load %arg2[%177] : memref<168xf32, #tpu.memory_space<smem>>
    %179 = vector.broadcast %170 : f32 to vector<8x128xf32>
    %180 = arith.mulf %179, %26 : vector<8x128xf32>
    %181 = vector.broadcast %174 : f32 to vector<8x128xf32>
    %182 = arith.mulf %181, %36 : vector<8x128xf32>
    %183 = arith.addf %180, %182 : vector<8x128xf32>
    %184 = vector.broadcast %178 : f32 to vector<8x128xf32>
    %185 = arith.addf %183, %184 : vector<8x128xf32>
    %186 = arith.select %128, %185, %41 : vector<8x128xi1>, vector<8x128xf32>
    %c1_i32_47 = arith.constant 1 : i32
    %c21_i32_48 = arith.constant 21 : i32
    %187 = arith.muli %c1_i32_47, %c21_i32_48 : i32
    %188 = arith.addi %37, %187 : i32
    %c0_i32_49 = arith.constant 0 : i32
    %189 = arith.addi %188, %c0_i32_49 : i32
    %190 = arith.index_cast %189 : i32 to index
    %191 = memref.load %arg2[%190] : memref<168xf32, #tpu.memory_space<smem>>
    %c0_i32_50 = arith.constant 0 : i32
    %192 = arith.addi %188, %c0_i32_50 : i32
    %c1_i32_51 = arith.constant 1 : i32
    %193 = arith.addi %192, %c1_i32_51 : i32
    %194 = arith.index_cast %193 : i32 to index
    %195 = memref.load %arg2[%194] : memref<168xf32, #tpu.memory_space<smem>>
    %c0_i32_52 = arith.constant 0 : i32
    %196 = arith.addi %188, %c0_i32_52 : i32
    %c2_i32_53 = arith.constant 2 : i32
    %197 = arith.addi %196, %c2_i32_53 : i32
    %198 = arith.index_cast %197 : i32 to index
    %199 = memref.load %arg2[%198] : memref<168xf32, #tpu.memory_space<smem>>
    %200 = vector.broadcast %191 : f32 to vector<8x128xf32>
    %201 = arith.mulf %200, %26 : vector<8x128xf32>
    %202 = vector.broadcast %195 : f32 to vector<8x128xf32>
    %203 = arith.mulf %202, %36 : vector<8x128xf32>
    %204 = arith.addf %201, %203 : vector<8x128xf32>
    %205 = vector.broadcast %199 : f32 to vector<8x128xf32>
    %206 = arith.addf %204, %205 : vector<8x128xf32>
    %c3_i32_54 = arith.constant 3 : i32
    %207 = arith.addi %188, %c3_i32_54 : i32
    %208 = arith.index_cast %207 : i32 to index
    %209 = memref.load %arg2[%208] : memref<168xf32, #tpu.memory_space<smem>>
    %c3_i32_55 = arith.constant 3 : i32
    %210 = arith.addi %188, %c3_i32_55 : i32
    %c1_i32_56 = arith.constant 1 : i32
    %211 = arith.addi %210, %c1_i32_56 : i32
    %212 = arith.index_cast %211 : i32 to index
    %213 = memref.load %arg2[%212] : memref<168xf32, #tpu.memory_space<smem>>
    %c3_i32_57 = arith.constant 3 : i32
    %214 = arith.addi %188, %c3_i32_57 : i32
    %c2_i32_58 = arith.constant 2 : i32
    %215 = arith.addi %214, %c2_i32_58 : i32
    %216 = arith.index_cast %215 : i32 to index
    %217 = memref.load %arg2[%216] : memref<168xf32, #tpu.memory_space<smem>>
    %218 = vector.broadcast %209 : f32 to vector<8x128xf32>
    %219 = arith.mulf %218, %26 : vector<8x128xf32>
    %220 = vector.broadcast %213 : f32 to vector<8x128xf32>
    %221 = arith.mulf %220, %36 : vector<8x128xf32>
    %222 = arith.addf %219, %221 : vector<8x128xf32>
    %223 = vector.broadcast %217 : f32 to vector<8x128xf32>
    %224 = arith.addf %222, %223 : vector<8x128xf32>
    %c6_i32_59 = arith.constant 6 : i32
    %225 = arith.addi %188, %c6_i32_59 : i32
    %226 = arith.index_cast %225 : i32 to index
    %227 = memref.load %arg2[%226] : memref<168xf32, #tpu.memory_space<smem>>
    %c6_i32_60 = arith.constant 6 : i32
    %228 = arith.addi %188, %c6_i32_60 : i32
    %c1_i32_61 = arith.constant 1 : i32
    %229 = arith.addi %228, %c1_i32_61 : i32
    %230 = arith.index_cast %229 : i32 to index
    %231 = memref.load %arg2[%230] : memref<168xf32, #tpu.memory_space<smem>>
    %c6_i32_62 = arith.constant 6 : i32
    %232 = arith.addi %188, %c6_i32_62 : i32
    %c2_i32_63 = arith.constant 2 : i32
    %233 = arith.addi %232, %c2_i32_63 : i32
    %234 = arith.index_cast %233 : i32 to index
    %235 = memref.load %arg2[%234] : memref<168xf32, #tpu.memory_space<smem>>
    %236 = vector.broadcast %227 : f32 to vector<8x128xf32>
    %237 = arith.mulf %236, %26 : vector<8x128xf32>
    %238 = vector.broadcast %231 : f32 to vector<8x128xf32>
    %239 = arith.mulf %238, %36 : vector<8x128xf32>
    %240 = arith.addf %237, %239 : vector<8x128xf32>
    %241 = vector.broadcast %235 : f32 to vector<8x128xf32>
    %242 = arith.addf %240, %241 : vector<8x128xf32>
    %c9_i32_64 = arith.constant 9 : i32
    %243 = arith.addi %188, %c9_i32_64 : i32
    %244 = arith.index_cast %243 : i32 to index
    %245 = memref.load %arg2[%244] : memref<168xf32, #tpu.memory_space<smem>>
    %c9_i32_65 = arith.constant 9 : i32
    %246 = arith.addi %188, %c9_i32_65 : i32
    %c1_i32_66 = arith.constant 1 : i32
    %247 = arith.addi %246, %c1_i32_66 : i32
    %248 = arith.index_cast %247 : i32 to index
    %249 = memref.load %arg2[%248] : memref<168xf32, #tpu.memory_space<smem>>
    %c9_i32_67 = arith.constant 9 : i32
    %250 = arith.addi %188, %c9_i32_67 : i32
    %c2_i32_68 = arith.constant 2 : i32
    %251 = arith.addi %250, %c2_i32_68 : i32
    %252 = arith.index_cast %251 : i32 to index
    %253 = memref.load %arg2[%252] : memref<168xf32, #tpu.memory_space<smem>>
    %254 = vector.broadcast %245 : f32 to vector<8x128xf32>
    %255 = arith.mulf %254, %26 : vector<8x128xf32>
    %256 = vector.broadcast %249 : f32 to vector<8x128xf32>
    %257 = arith.mulf %256, %36 : vector<8x128xf32>
    %258 = arith.addf %255, %257 : vector<8x128xf32>
    %259 = vector.broadcast %253 : f32 to vector<8x128xf32>
    %260 = arith.addf %258, %259 : vector<8x128xf32>
    %cst_69 = arith.constant 0.000000e+00 : f32
    %261 = vector.broadcast %cst_69 : f32 to vector<8x128xf32>
    %262 = arith.cmpf ogt, %206, %261 : vector<8x128xf32>
    %cst_70 = arith.constant 0.000000e+00 : f32
    %263 = vector.broadcast %cst_70 : f32 to vector<8x128xf32>
    %264 = arith.cmpf ogt, %224, %263 : vector<8x128xf32>
    %265 = arith.andi %262, %264 : vector<8x128xi1>
    %cst_71 = arith.constant 0.000000e+00 : f32
    %266 = vector.broadcast %cst_71 : f32 to vector<8x128xf32>
    %267 = arith.cmpf ogt, %242, %266 : vector<8x128xf32>
    %268 = arith.andi %265, %267 : vector<8x128xi1>
    %cst_72 = arith.constant 0.000000e+00 : f32
    %269 = vector.broadcast %cst_72 : f32 to vector<8x128xf32>
    %270 = arith.cmpf oge, %260, %269 : vector<8x128xf32>
    %271 = arith.andi %268, %270 : vector<8x128xi1>
    %272 = arith.cmpf olt, %260, %129 : vector<8x128xf32>
    %273 = arith.andi %271, %272 : vector<8x128xi1>
    %274 = arith.select %273, %260, %129 : vector<8x128xi1>, vector<8x128xf32>
    %c12_i32_73 = arith.constant 12 : i32
    %275 = arith.addi %188, %c12_i32_73 : i32
    %276 = arith.index_cast %275 : i32 to index
    %277 = memref.load %arg2[%276] : memref<168xf32, #tpu.memory_space<smem>>
    %c12_i32_74 = arith.constant 12 : i32
    %278 = arith.addi %188, %c12_i32_74 : i32
    %c1_i32_75 = arith.constant 1 : i32
    %279 = arith.addi %278, %c1_i32_75 : i32
    %280 = arith.index_cast %279 : i32 to index
    %281 = memref.load %arg2[%280] : memref<168xf32, #tpu.memory_space<smem>>
    %c12_i32_76 = arith.constant 12 : i32
    %282 = arith.addi %188, %c12_i32_76 : i32
    %c2_i32_77 = arith.constant 2 : i32
    %283 = arith.addi %282, %c2_i32_77 : i32
    %284 = arith.index_cast %283 : i32 to index
    %285 = memref.load %arg2[%284] : memref<168xf32, #tpu.memory_space<smem>>
    %286 = vector.broadcast %277 : f32 to vector<8x128xf32>
    %287 = arith.mulf %286, %26 : vector<8x128xf32>
    %288 = vector.broadcast %281 : f32 to vector<8x128xf32>
    %289 = arith.mulf %288, %36 : vector<8x128xf32>
    %290 = arith.addf %287, %289 : vector<8x128xf32>
    %291 = vector.broadcast %285 : f32 to vector<8x128xf32>
    %292 = arith.addf %290, %291 : vector<8x128xf32>
    %293 = arith.select %273, %292, %148 : vector<8x128xi1>, vector<8x128xf32>
    %c15_i32_78 = arith.constant 15 : i32
    %294 = arith.addi %188, %c15_i32_78 : i32
    %295 = arith.index_cast %294 : i32 to index
    %296 = memref.load %arg2[%295] : memref<168xf32, #tpu.memory_space<smem>>
    %c15_i32_79 = arith.constant 15 : i32
    %297 = arith.addi %188, %c15_i32_79 : i32
    %c1_i32_80 = arith.constant 1 : i32
    %298 = arith.addi %297, %c1_i32_80 : i32
    %299 = arith.index_cast %298 : i32 to index
    %300 = memref.load %arg2[%299] : memref<168xf32, #tpu.memory_space<smem>>
    %c15_i32_81 = arith.constant 15 : i32
    %301 = arith.addi %188, %c15_i32_81 : i32
    %c2_i32_82 = arith.constant 2 : i32
    %302 = arith.addi %301, %c2_i32_82 : i32
    %303 = arith.index_cast %302 : i32 to index
    %304 = memref.load %arg2[%303] : memref<168xf32, #tpu.memory_space<smem>>
    %305 = vector.broadcast %296 : f32 to vector<8x128xf32>
    %306 = arith.mulf %305, %26 : vector<8x128xf32>
    %307 = vector.broadcast %300 : f32 to vector<8x128xf32>
    %308 = arith.mulf %307, %36 : vector<8x128xf32>
    %309 = arith.addf %306, %308 : vector<8x128xf32>
    %310 = vector.broadcast %304 : f32 to vector<8x128xf32>
    %311 = arith.addf %309, %310 : vector<8x128xf32>
    %312 = arith.select %273, %311, %167 : vector<8x128xi1>, vector<8x128xf32>
    %c18_i32_83 = arith.constant 18 : i32
    %313 = arith.addi %188, %c18_i32_83 : i32
    %314 = arith.index_cast %313 : i32 to index
    %315 = memref.load %arg2[%314] : memref<168xf32, #tpu.memory_space<smem>>
    %c18_i32_84 = arith.constant 18 : i32
    %316 = arith.addi %188, %c18_i32_84 : i32
    %c1_i32_85 = arith.constant 1 : i32
    %317 = arith.addi %316, %c1_i32_85 : i32
    %318 = arith.index_cast %317 : i32 to index
    %319 = memref.load %arg2[%318] : memref<168xf32, #tpu.memory_space<smem>>
    %c18_i32_86 = arith.constant 18 : i32
    %320 = arith.addi %188, %c18_i32_86 : i32
    %c2_i32_87 = arith.constant 2 : i32
    %321 = arith.addi %320, %c2_i32_87 : i32
    %322 = arith.index_cast %321 : i32 to index
    %323 = memref.load %arg2[%322] : memref<168xf32, #tpu.memory_space<smem>>
    %324 = vector.broadcast %315 : f32 to vector<8x128xf32>
    %325 = arith.mulf %324, %26 : vector<8x128xf32>
    %326 = vector.broadcast %319 : f32 to vector<8x128xf32>
    %327 = arith.mulf %326, %36 : vector<8x128xf32>
    %328 = arith.addf %325, %327 : vector<8x128xf32>
    %329 = vector.broadcast %323 : f32 to vector<8x128xf32>
    %330 = arith.addf %328, %329 : vector<8x128xf32>
    %331 = arith.select %273, %330, %186 : vector<8x128xi1>, vector<8x128xf32>
    %c2_i32_88 = arith.constant 2 : i32
    %c21_i32_89 = arith.constant 21 : i32
    %332 = arith.muli %c2_i32_88, %c21_i32_89 : i32
    %333 = arith.addi %37, %332 : i32
    %c0_i32_90 = arith.constant 0 : i32
    %334 = arith.addi %333, %c0_i32_90 : i32
    %335 = arith.index_cast %334 : i32 to index
    %336 = memref.load %arg2[%335] : memref<168xf32, #tpu.memory_space<smem>>
    %c0_i32_91 = arith.constant 0 : i32
    %337 = arith.addi %333, %c0_i32_91 : i32
    %c1_i32_92 = arith.constant 1 : i32
    %338 = arith.addi %337, %c1_i32_92 : i32
    %339 = arith.index_cast %338 : i32 to index
    %340 = memref.load %arg2[%339] : memref<168xf32, #tpu.memory_space<smem>>
    %c0_i32_93 = arith.constant 0 : i32
    %341 = arith.addi %333, %c0_i32_93 : i32
    %c2_i32_94 = arith.constant 2 : i32
    %342 = arith.addi %341, %c2_i32_94 : i32
    %343 = arith.index_cast %342 : i32 to index
    %344 = memref.load %arg2[%343] : memref<168xf32, #tpu.memory_space<smem>>
    %345 = vector.broadcast %336 : f32 to vector<8x128xf32>
    %346 = arith.mulf %345, %26 : vector<8x128xf32>
    %347 = vector.broadcast %340 : f32 to vector<8x128xf32>
    %348 = arith.mulf %347, %36 : vector<8x128xf32>
    %349 = arith.addf %346, %348 : vector<8x128xf32>
    %350 = vector.broadcast %344 : f32 to vector<8x128xf32>
    %351 = arith.addf %349, %350 : vector<8x128xf32>
    %c3_i32_95 = arith.constant 3 : i32
    %352 = arith.addi %333, %c3_i32_95 : i32
    %353 = arith.index_cast %352 : i32 to index
    %354 = memref.load %arg2[%353] : memref<168xf32, #tpu.memory_space<smem>>
    %c3_i32_96 = arith.constant 3 : i32
    %355 = arith.addi %333, %c3_i32_96 : i32
    %c1_i32_97 = arith.constant 1 : i32
    %356 = arith.addi %355, %c1_i32_97 : i32
    %357 = arith.index_cast %356 : i32 to index
    %358 = memref.load %arg2[%357] : memref<168xf32, #tpu.memory_space<smem>>
    %c3_i32_98 = arith.constant 3 : i32
    %359 = arith.addi %333, %c3_i32_98 : i32
    %c2_i32_99 = arith.constant 2 : i32
    %360 = arith.addi %359, %c2_i32_99 : i32
    %361 = arith.index_cast %360 : i32 to index
    %362 = memref.load %arg2[%361] : memref<168xf32, #tpu.memory_space<smem>>
    %363 = vector.broadcast %354 : f32 to vector<8x128xf32>
    %364 = arith.mulf %363, %26 : vector<8x128xf32>
    %365 = vector.broadcast %358 : f32 to vector<8x128xf32>
    %366 = arith.mulf %365, %36 : vector<8x128xf32>
    %367 = arith.addf %364, %366 : vector<8x128xf32>
    %368 = vector.broadcast %362 : f32 to vector<8x128xf32>
    %369 = arith.addf %367, %368 : vector<8x128xf32>
    %c6_i32_100 = arith.constant 6 : i32
    %370 = arith.addi %333, %c6_i32_100 : i32
    %371 = arith.index_cast %370 : i32 to index
    %372 = memref.load %arg2[%371] : memref<168xf32, #tpu.memory_space<smem>>
    %c6_i32_101 = arith.constant 6 : i32
    %373 = arith.addi %333, %c6_i32_101 : i32
    %c1_i32_102 = arith.constant 1 : i32
    %374 = arith.addi %373, %c1_i32_102 : i32
    %375 = arith.index_cast %374 : i32 to index
    %376 = memref.load %arg2[%375] : memref<168xf32, #tpu.memory_space<smem>>
    %c6_i32_103 = arith.constant 6 : i32
    %377 = arith.addi %333, %c6_i32_103 : i32
    %c2_i32_104 = arith.constant 2 : i32
    %378 = arith.addi %377, %c2_i32_104 : i32
    %379 = arith.index_cast %378 : i32 to index
    %380 = memref.load %arg2[%379] : memref<168xf32, #tpu.memory_space<smem>>
    %381 = vector.broadcast %372 : f32 to vector<8x128xf32>
    %382 = arith.mulf %381, %26 : vector<8x128xf32>
    %383 = vector.broadcast %376 : f32 to vector<8x128xf32>
    %384 = arith.mulf %383, %36 : vector<8x128xf32>
    %385 = arith.addf %382, %384 : vector<8x128xf32>
    %386 = vector.broadcast %380 : f32 to vector<8x128xf32>
    %387 = arith.addf %385, %386 : vector<8x128xf32>
    %c9_i32_105 = arith.constant 9 : i32
    %388 = arith.addi %333, %c9_i32_105 : i32
    %389 = arith.index_cast %388 : i32 to index
    %390 = memref.load %arg2[%389] : memref<168xf32, #tpu.memory_space<smem>>
    %c9_i32_106 = arith.constant 9 : i32
    %391 = arith.addi %333, %c9_i32_106 : i32
    %c1_i32_107 = arith.constant 1 : i32
    %392 = arith.addi %391, %c1_i32_107 : i32
    %393 = arith.index_cast %392 : i32 to index
    %394 = memref.load %arg2[%393] : memref<168xf32, #tpu.memory_space<smem>>
    %c9_i32_108 = arith.constant 9 : i32
    %395 = arith.addi %333, %c9_i32_108 : i32
    %c2_i32_109 = arith.constant 2 : i32
    %396 = arith.addi %395, %c2_i32_109 : i32
    %397 = arith.index_cast %396 : i32 to index
    %398 = memref.load %arg2[%397] : memref<168xf32, #tpu.memory_space<smem>>
    %399 = vector.broadcast %390 : f32 to vector<8x128xf32>
    %400 = arith.mulf %399, %26 : vector<8x128xf32>
    %401 = vector.broadcast %394 : f32 to vector<8x128xf32>
    %402 = arith.mulf %401, %36 : vector<8x128xf32>
    %403 = arith.addf %400, %402 : vector<8x128xf32>
    %404 = vector.broadcast %398 : f32 to vector<8x128xf32>
    %405 = arith.addf %403, %404 : vector<8x128xf32>
    %cst_110 = arith.constant 0.000000e+00 : f32
    %406 = vector.broadcast %cst_110 : f32 to vector<8x128xf32>
    %407 = arith.cmpf ogt, %351, %406 : vector<8x128xf32>
    %cst_111 = arith.constant 0.000000e+00 : f32
    %408 = vector.broadcast %cst_111 : f32 to vector<8x128xf32>
    %409 = arith.cmpf ogt, %369, %408 : vector<8x128xf32>
    %410 = arith.andi %407, %409 : vector<8x128xi1>
    %cst_112 = arith.constant 0.000000e+00 : f32
    %411 = vector.broadcast %cst_112 : f32 to vector<8x128xf32>
    %412 = arith.cmpf ogt, %387, %411 : vector<8x128xf32>
    %413 = arith.andi %410, %412 : vector<8x128xi1>
    %cst_113 = arith.constant 0.000000e+00 : f32
    %414 = vector.broadcast %cst_113 : f32 to vector<8x128xf32>
    %415 = arith.cmpf oge, %405, %414 : vector<8x128xf32>
    %416 = arith.andi %413, %415 : vector<8x128xi1>
    %417 = arith.cmpf olt, %405, %274 : vector<8x128xf32>
    %418 = arith.andi %416, %417 : vector<8x128xi1>
    %419 = arith.select %418, %405, %274 : vector<8x128xi1>, vector<8x128xf32>
    %c12_i32_114 = arith.constant 12 : i32
    %420 = arith.addi %333, %c12_i32_114 : i32
    %421 = arith.index_cast %420 : i32 to index
    %422 = memref.load %arg2[%421] : memref<168xf32, #tpu.memory_space<smem>>
    %c12_i32_115 = arith.constant 12 : i32
    %423 = arith.addi %333, %c12_i32_115 : i32
    %c1_i32_116 = arith.constant 1 : i32
    %424 = arith.addi %423, %c1_i32_116 : i32
    %425 = arith.index_cast %424 : i32 to index
    %426 = memref.load %arg2[%425] : memref<168xf32, #tpu.memory_space<smem>>
    %c12_i32_117 = arith.constant 12 : i32
    %427 = arith.addi %333, %c12_i32_117 : i32
    %c2_i32_118 = arith.constant 2 : i32
    %428 = arith.addi %427, %c2_i32_118 : i32
    %429 = arith.index_cast %428 : i32 to index
    %430 = memref.load %arg2[%429] : memref<168xf32, #tpu.memory_space<smem>>
    %431 = vector.broadcast %422 : f32 to vector<8x128xf32>
    %432 = arith.mulf %431, %26 : vector<8x128xf32>
    %433 = vector.broadcast %426 : f32 to vector<8x128xf32>
    %434 = arith.mulf %433, %36 : vector<8x128xf32>
    %435 = arith.addf %432, %434 : vector<8x128xf32>
    %436 = vector.broadcast %430 : f32 to vector<8x128xf32>
    %437 = arith.addf %435, %436 : vector<8x128xf32>
    %438 = arith.select %418, %437, %293 : vector<8x128xi1>, vector<8x128xf32>
    %c15_i32_119 = arith.constant 15 : i32
    %439 = arith.addi %333, %c15_i32_119 : i32
    %440 = arith.index_cast %439 : i32 to index
    %441 = memref.load %arg2[%440] : memref<168xf32, #tpu.memory_space<smem>>
    %c15_i32_120 = arith.constant 15 : i32
    %442 = arith.addi %333, %c15_i32_120 : i32
    %c1_i32_121 = arith.constant 1 : i32
    %443 = arith.addi %442, %c1_i32_121 : i32
    %444 = arith.index_cast %443 : i32 to index
    %445 = memref.load %arg2[%444] : memref<168xf32, #tpu.memory_space<smem>>
    %c15_i32_122 = arith.constant 15 : i32
    %446 = arith.addi %333, %c15_i32_122 : i32
    %c2_i32_123 = arith.constant 2 : i32
    %447 = arith.addi %446, %c2_i32_123 : i32
    %448 = arith.index_cast %447 : i32 to index
    %449 = memref.load %arg2[%448] : memref<168xf32, #tpu.memory_space<smem>>
    %450 = vector.broadcast %441 : f32 to vector<8x128xf32>
    %451 = arith.mulf %450, %26 : vector<8x128xf32>
    %452 = vector.broadcast %445 : f32 to vector<8x128xf32>
    %453 = arith.mulf %452, %36 : vector<8x128xf32>
    %454 = arith.addf %451, %453 : vector<8x128xf32>
    %455 = vector.broadcast %449 : f32 to vector<8x128xf32>
    %456 = arith.addf %454, %455 : vector<8x128xf32>
    %457 = arith.select %418, %456, %312 : vector<8x128xi1>, vector<8x128xf32>
    %c18_i32_124 = arith.constant 18 : i32
    %458 = arith.addi %333, %c18_i32_124 : i32
    %459 = arith.index_cast %458 : i32 to index
    %460 = memref.load %arg2[%459] : memref<168xf32, #tpu.memory_space<smem>>
    %c18_i32_125 = arith.constant 18 : i32
    %461 = arith.addi %333, %c18_i32_125 : i32
    %c1_i32_126 = arith.constant 1 : i32
    %462 = arith.addi %461, %c1_i32_126 : i32
    %463 = arith.index_cast %462 : i32 to index
    %464 = memref.load %arg2[%463] : memref<168xf32, #tpu.memory_space<smem>>
    %c18_i32_127 = arith.constant 18 : i32
    %465 = arith.addi %333, %c18_i32_127 : i32
    %c2_i32_128 = arith.constant 2 : i32
    %466 = arith.addi %465, %c2_i32_128 : i32
    %467 = arith.index_cast %466 : i32 to index
    %468 = memref.load %arg2[%467] : memref<168xf32, #tpu.memory_space<smem>>
    %469 = vector.broadcast %460 : f32 to vector<8x128xf32>
    %470 = arith.mulf %469, %26 : vector<8x128xf32>
    %471 = vector.broadcast %464 : f32 to vector<8x128xf32>
    %472 = arith.mulf %471, %36 : vector<8x128xf32>
    %473 = arith.addf %470, %472 : vector<8x128xf32>
    %474 = vector.broadcast %468 : f32 to vector<8x128xf32>
    %475 = arith.addf %473, %474 : vector<8x128xf32>
    %476 = arith.select %418, %475, %331 : vector<8x128xi1>, vector<8x128xf32>
    %c3_i32_129 = arith.constant 3 : i32
    %c21_i32_130 = arith.constant 21 : i32
    %477 = arith.muli %c3_i32_129, %c21_i32_130 : i32
    %478 = arith.addi %37, %477 : i32
    %c0_i32_131 = arith.constant 0 : i32
    %479 = arith.addi %478, %c0_i32_131 : i32
    %480 = arith.index_cast %479 : i32 to index
    %481 = memref.load %arg2[%480] : memref<168xf32, #tpu.memory_space<smem>>
    %c0_i32_132 = arith.constant 0 : i32
    %482 = arith.addi %478, %c0_i32_132 : i32
    %c1_i32_133 = arith.constant 1 : i32
    %483 = arith.addi %482, %c1_i32_133 : i32
    %484 = arith.index_cast %483 : i32 to index
    %485 = memref.load %arg2[%484] : memref<168xf32, #tpu.memory_space<smem>>
    %c0_i32_134 = arith.constant 0 : i32
    %486 = arith.addi %478, %c0_i32_134 : i32
    %c2_i32_135 = arith.constant 2 : i32
    %487 = arith.addi %486, %c2_i32_135 : i32
    %488 = arith.index_cast %487 : i32 to index
    %489 = memref.load %arg2[%488] : memref<168xf32, #tpu.memory_space<smem>>
    %490 = vector.broadcast %481 : f32 to vector<8x128xf32>
    %491 = arith.mulf %490, %26 : vector<8x128xf32>
    %492 = vector.broadcast %485 : f32 to vector<8x128xf32>
    %493 = arith.mulf %492, %36 : vector<8x128xf32>
    %494 = arith.addf %491, %493 : vector<8x128xf32>
    %495 = vector.broadcast %489 : f32 to vector<8x128xf32>
    %496 = arith.addf %494, %495 : vector<8x128xf32>
    %c3_i32_136 = arith.constant 3 : i32
    %497 = arith.addi %478, %c3_i32_136 : i32
    %498 = arith.index_cast %497 : i32 to index
    %499 = memref.load %arg2[%498] : memref<168xf32, #tpu.memory_space<smem>>
    %c3_i32_137 = arith.constant 3 : i32
    %500 = arith.addi %478, %c3_i32_137 : i32
    %c1_i32_138 = arith.constant 1 : i32
    %501 = arith.addi %500, %c1_i32_138 : i32
    %502 = arith.index_cast %501 : i32 to index
    %503 = memref.load %arg2[%502] : memref<168xf32, #tpu.memory_space<smem>>
    %c3_i32_139 = arith.constant 3 : i32
    %504 = arith.addi %478, %c3_i32_139 : i32
    %c2_i32_140 = arith.constant 2 : i32
    %505 = arith.addi %504, %c2_i32_140 : i32
    %506 = arith.index_cast %505 : i32 to index
    %507 = memref.load %arg2[%506] : memref<168xf32, #tpu.memory_space<smem>>
    %508 = vector.broadcast %499 : f32 to vector<8x128xf32>
    %509 = arith.mulf %508, %26 : vector<8x128xf32>
    %510 = vector.broadcast %503 : f32 to vector<8x128xf32>
    %511 = arith.mulf %510, %36 : vector<8x128xf32>
    %512 = arith.addf %509, %511 : vector<8x128xf32>
    %513 = vector.broadcast %507 : f32 to vector<8x128xf32>
    %514 = arith.addf %512, %513 : vector<8x128xf32>
    %c6_i32_141 = arith.constant 6 : i32
    %515 = arith.addi %478, %c6_i32_141 : i32
    %516 = arith.index_cast %515 : i32 to index
    %517 = memref.load %arg2[%516] : memref<168xf32, #tpu.memory_space<smem>>
    %c6_i32_142 = arith.constant 6 : i32
    %518 = arith.addi %478, %c6_i32_142 : i32
    %c1_i32_143 = arith.constant 1 : i32
    %519 = arith.addi %518, %c1_i32_143 : i32
    %520 = arith.index_cast %519 : i32 to index
    %521 = memref.load %arg2[%520] : memref<168xf32, #tpu.memory_space<smem>>
    %c6_i32_144 = arith.constant 6 : i32
    %522 = arith.addi %478, %c6_i32_144 : i32
    %c2_i32_145 = arith.constant 2 : i32
    %523 = arith.addi %522, %c2_i32_145 : i32
    %524 = arith.index_cast %523 : i32 to index
    %525 = memref.load %arg2[%524] : memref<168xf32, #tpu.memory_space<smem>>
    %526 = vector.broadcast %517 : f32 to vector<8x128xf32>
    %527 = arith.mulf %526, %26 : vector<8x128xf32>
    %528 = vector.broadcast %521 : f32 to vector<8x128xf32>
    %529 = arith.mulf %528, %36 : vector<8x128xf32>
    %530 = arith.addf %527, %529 : vector<8x128xf32>
    %531 = vector.broadcast %525 : f32 to vector<8x128xf32>
    %532 = arith.addf %530, %531 : vector<8x128xf32>
    %c9_i32_146 = arith.constant 9 : i32
    %533 = arith.addi %478, %c9_i32_146 : i32
    %534 = arith.index_cast %533 : i32 to index
    %535 = memref.load %arg2[%534] : memref<168xf32, #tpu.memory_space<smem>>
    %c9_i32_147 = arith.constant 9 : i32
    %536 = arith.addi %478, %c9_i32_147 : i32
    %c1_i32_148 = arith.constant 1 : i32
    %537 = arith.addi %536, %c1_i32_148 : i32
    %538 = arith.index_cast %537 : i32 to index
    %539 = memref.load %arg2[%538] : memref<168xf32, #tpu.memory_space<smem>>
    %c9_i32_149 = arith.constant 9 : i32
    %540 = arith.addi %478, %c9_i32_149 : i32
    %c2_i32_150 = arith.constant 2 : i32
    %541 = arith.addi %540, %c2_i32_150 : i32
    %542 = arith.index_cast %541 : i32 to index
    %543 = memref.load %arg2[%542] : memref<168xf32, #tpu.memory_space<smem>>
    %544 = vector.broadcast %535 : f32 to vector<8x128xf32>
    %545 = arith.mulf %544, %26 : vector<8x128xf32>
    %546 = vector.broadcast %539 : f32 to vector<8x128xf32>
    %547 = arith.mulf %546, %36 : vector<8x128xf32>
    %548 = arith.addf %545, %547 : vector<8x128xf32>
    %549 = vector.broadcast %543 : f32 to vector<8x128xf32>
    %550 = arith.addf %548, %549 : vector<8x128xf32>
    %cst_151 = arith.constant 0.000000e+00 : f32
    %551 = vector.broadcast %cst_151 : f32 to vector<8x128xf32>
    %552 = arith.cmpf ogt, %496, %551 : vector<8x128xf32>
    %cst_152 = arith.constant 0.000000e+00 : f32
    %553 = vector.broadcast %cst_152 : f32 to vector<8x128xf32>
    %554 = arith.cmpf ogt, %514, %553 : vector<8x128xf32>
    %555 = arith.andi %552, %554 : vector<8x128xi1>
    %cst_153 = arith.constant 0.000000e+00 : f32
    %556 = vector.broadcast %cst_153 : f32 to vector<8x128xf32>
    %557 = arith.cmpf ogt, %532, %556 : vector<8x128xf32>
    %558 = arith.andi %555, %557 : vector<8x128xi1>
    %cst_154 = arith.constant 0.000000e+00 : f32
    %559 = vector.broadcast %cst_154 : f32 to vector<8x128xf32>
    %560 = arith.cmpf oge, %550, %559 : vector<8x128xf32>
    %561 = arith.andi %558, %560 : vector<8x128xi1>
    %562 = arith.cmpf olt, %550, %419 : vector<8x128xf32>
    %563 = arith.andi %561, %562 : vector<8x128xi1>
    %564 = arith.select %563, %550, %419 : vector<8x128xi1>, vector<8x128xf32>
    %c12_i32_155 = arith.constant 12 : i32
    %565 = arith.addi %478, %c12_i32_155 : i32
    %566 = arith.index_cast %565 : i32 to index
    %567 = memref.load %arg2[%566] : memref<168xf32, #tpu.memory_space<smem>>
    %c12_i32_156 = arith.constant 12 : i32
    %568 = arith.addi %478, %c12_i32_156 : i32
    %c1_i32_157 = arith.constant 1 : i32
    %569 = arith.addi %568, %c1_i32_157 : i32
    %570 = arith.index_cast %569 : i32 to index
    %571 = memref.load %arg2[%570] : memref<168xf32, #tpu.memory_space<smem>>
    %c12_i32_158 = arith.constant 12 : i32
    %572 = arith.addi %478, %c12_i32_158 : i32
    %c2_i32_159 = arith.constant 2 : i32
    %573 = arith.addi %572, %c2_i32_159 : i32
    %574 = arith.index_cast %573 : i32 to index
    %575 = memref.load %arg2[%574] : memref<168xf32, #tpu.memory_space<smem>>
    %576 = vector.broadcast %567 : f32 to vector<8x128xf32>
    %577 = arith.mulf %576, %26 : vector<8x128xf32>
    %578 = vector.broadcast %571 : f32 to vector<8x128xf32>
    %579 = arith.mulf %578, %36 : vector<8x128xf32>
    %580 = arith.addf %577, %579 : vector<8x128xf32>
    %581 = vector.broadcast %575 : f32 to vector<8x128xf32>
    %582 = arith.addf %580, %581 : vector<8x128xf32>
    %583 = arith.select %563, %582, %438 : vector<8x128xi1>, vector<8x128xf32>
    %c15_i32_160 = arith.constant 15 : i32
    %584 = arith.addi %478, %c15_i32_160 : i32
    %585 = arith.index_cast %584 : i32 to index
    %586 = memref.load %arg2[%585] : memref<168xf32, #tpu.memory_space<smem>>
    %c15_i32_161 = arith.constant 15 : i32
    %587 = arith.addi %478, %c15_i32_161 : i32
    %c1_i32_162 = arith.constant 1 : i32
    %588 = arith.addi %587, %c1_i32_162 : i32
    %589 = arith.index_cast %588 : i32 to index
    %590 = memref.load %arg2[%589] : memref<168xf32, #tpu.memory_space<smem>>
    %c15_i32_163 = arith.constant 15 : i32
    %591 = arith.addi %478, %c15_i32_163 : i32
    %c2_i32_164 = arith.constant 2 : i32
    %592 = arith.addi %591, %c2_i32_164 : i32
    %593 = arith.index_cast %592 : i32 to index
    %594 = memref.load %arg2[%593] : memref<168xf32, #tpu.memory_space<smem>>
    %595 = vector.broadcast %586 : f32 to vector<8x128xf32>
    %596 = arith.mulf %595, %26 : vector<8x128xf32>
    %597 = vector.broadcast %590 : f32 to vector<8x128xf32>
    %598 = arith.mulf %597, %36 : vector<8x128xf32>
    %599 = arith.addf %596, %598 : vector<8x128xf32>
    %600 = vector.broadcast %594 : f32 to vector<8x128xf32>
    %601 = arith.addf %599, %600 : vector<8x128xf32>
    %602 = arith.select %563, %601, %457 : vector<8x128xi1>, vector<8x128xf32>
    %c18_i32_165 = arith.constant 18 : i32
    %603 = arith.addi %478, %c18_i32_165 : i32
    %604 = arith.index_cast %603 : i32 to index
    %605 = memref.load %arg2[%604] : memref<168xf32, #tpu.memory_space<smem>>
    %c18_i32_166 = arith.constant 18 : i32
    %606 = arith.addi %478, %c18_i32_166 : i32
    %c1_i32_167 = arith.constant 1 : i32
    %607 = arith.addi %606, %c1_i32_167 : i32
    %608 = arith.index_cast %607 : i32 to index
    %609 = memref.load %arg2[%608] : memref<168xf32, #tpu.memory_space<smem>>
    %c18_i32_168 = arith.constant 18 : i32
    %610 = arith.addi %478, %c18_i32_168 : i32
    %c2_i32_169 = arith.constant 2 : i32
    %611 = arith.addi %610, %c2_i32_169 : i32
    %612 = arith.index_cast %611 : i32 to index
    %613 = memref.load %arg2[%612] : memref<168xf32, #tpu.memory_space<smem>>
    %614 = vector.broadcast %605 : f32 to vector<8x128xf32>
    %615 = arith.mulf %614, %26 : vector<8x128xf32>
    %616 = vector.broadcast %609 : f32 to vector<8x128xf32>
    %617 = arith.mulf %616, %36 : vector<8x128xf32>
    %618 = arith.addf %615, %617 : vector<8x128xf32>
    %619 = vector.broadcast %613 : f32 to vector<8x128xf32>
    %620 = arith.addf %618, %619 : vector<8x128xf32>
    %621 = arith.select %563, %620, %476 : vector<8x128xi1>, vector<8x128xf32>
    %c4_i32 = arith.constant 4 : i32
    %c0 = arith.constant 0 : index
    %c0_170 = arith.constant 0 : index
    %c0_171 = arith.constant 0 : index
    %c0_172 = arith.constant 0 : index
    %622 = vector.load %arg3[%c0, %c0_170, %c0_171, %c0_172] : memref<1x4x8x128xf32, #tpu.memory_space<vmem>>, vector<1x1x8x128xf32>
    %623 = vector.shape_cast %622 : vector<1x1x8x128xf32> to vector<8x128xf32>
    %624 = vector.shape_cast %583 : vector<8x128xf32> to vector<1x1x8x128xf32>
    tpu.vector_store %arg3[%c0, %c0_170, %c0_171, %c0_172], %624 {strides = array<i32>} : memref<1x4x8x128xf32, #tpu.memory_space<vmem>>, vector<1x1x8x128xf32>,
    %c0_173 = arith.constant 0 : index
    %c1 = arith.constant 1 : index
    %c0_174 = arith.constant 0 : index
    %c0_175 = arith.constant 0 : index
    %625 = vector.load %arg3[%c0_173, %c1, %c0_174, %c0_175] : memref<1x4x8x128xf32, #tpu.memory_space<vmem>>, vector<1x1x8x128xf32>
    %626 = vector.shape_cast %625 : vector<1x1x8x128xf32> to vector<8x128xf32>
    %627 = vector.shape_cast %602 : vector<8x128xf32> to vector<1x1x8x128xf32>
    tpu.vector_store %arg3[%c0_173, %c1, %c0_174, %c0_175], %627 {strides = array<i32>} : memref<1x4x8x128xf32, #tpu.memory_space<vmem>>, vector<1x1x8x128xf32>,
    %c0_176 = arith.constant 0 : index
    %c2 = arith.constant 2 : index
    %c0_177 = arith.constant 0 : index
    %c0_178 = arith.constant 0 : index
    %628 = vector.load %arg3[%c0_176, %c2, %c0_177, %c0_178] : memref<1x4x8x128xf32, #tpu.memory_space<vmem>>, vector<1x1x8x128xf32>
    %629 = vector.shape_cast %628 : vector<1x1x8x128xf32> to vector<8x128xf32>
    %630 = vector.shape_cast %621 : vector<8x128xf32> to vector<1x1x8x128xf32>
    tpu.vector_store %arg3[%c0_176, %c2, %c0_177, %c0_178], %630 {strides = array<i32>} : memref<1x4x8x128xf32, #tpu.memory_space<vmem>>, vector<1x1x8x128xf32>,
    %cst_179 = arith.constant 1.000000e+10 : f32
    %631 = vector.broadcast %cst_179 : f32 to vector<8x128xf32>
    %632 = arith.cmpf olt, %564, %631 : vector<8x128xf32>
    %cst_180 = arith.constant 1.000000e+00 : f32
    %cst_181 = arith.constant 0.000000e+00 : f32
    %633 = vector.broadcast %cst_180 : f32 to vector<8x128xf32>
    %634 = vector.broadcast %cst_181 : f32 to vector<8x128xf32>
    %635 = arith.select %632, %633, %634 : vector<8x128xi1>, vector<8x128xf32>
    %c0_182 = arith.constant 0 : index
    %c3 = arith.constant 3 : index
    %c0_183 = arith.constant 0 : index
    %c0_184 = arith.constant 0 : index
    %636 = vector.load %arg3[%c0_182, %c3, %c0_183, %c0_184] : memref<1x4x8x128xf32, #tpu.memory_space<vmem>>, vector<1x1x8x128xf32>
    %637 = vector.shape_cast %636 : vector<1x1x8x128xf32> to vector<8x128xf32>
    %638 = vector.shape_cast %635 : vector<8x128xf32> to vector<1x1x8x128xf32>
    tpu.vector_store %arg3[%c0_182, %c3, %c0_183, %c0_184], %638 {strides = array<i32>} : memref<1x4x8x128xf32, #tpu.memory_space<vmem>>, vector<1x1x8x128xf32>,
    return
  }
  func.func @transform_0(%arg0: i32, %arg1: i32) -> i32 {
    %c0_i32 = arith.constant 0 : i32
    %c0_i32_0 = arith.constant 0 : i32
    return %c0_i32 : i32
  }
  func.func @transform_1(%arg0: i32, %arg1: i32) -> (i32, i32, i32, i32) {
    %c0_i32 = arith.constant 0 : i32
    %c0_i32_0 = arith.constant 0 : i32
    %c0_i32_1 = arith.constant 0 : i32
    return %arg0, %c0_i32, %arg1, %c0_i32_0 : i32, i32, i32, i32
  }
}

</mosaic_0001>

<llo_original>
// kernel: tpu_custom_call.1
$region0: #{tpu_custom_call.1}
  #allocation0 [shape = 'u32[]', space=smem, size = 0x4, offset = 0x4, fixed_abs, tag = 'smem constant byte address 0x4 - core index']
  #allocation1 [shape = 'u32[144,128]{1,0:T(1,128)}', space=vmem, size = 0x12000, scoped, tag = 'internal scratch']
  %s0 = inlined_call_operand.hbm [shape: f32[168], index: 0, kind: input, shape index: {}]
  %s1 = inlined_call_operand.hbm [shape: f32[2,4,8,128], index: 1, kind: output, shape index: {}]
  %s2 = sld [smem:[#allocation0]]
  $region41: #{tpu_custom_call.1} parent=0
    _
  %s4 = ssub.s32 1, %s2
  %s5 = scalar_select 0, %s4, %s2
  $region1: #{tpu_custom_call.1} parent=0
    #allocation2 [shape = 'u8[1024]{0}', space=smem, size = 0x400, scoped, tag = 'input window, operand 0, single buffered']
    #allocation3 [shape = 's32[2]{0}', space=sflag, size = 0x8, scoped, tag = 'scoped memory for tpu_custom_call.1']
    #allocation4 [shape = 's32[2]{0}', space=sflag, size = 0x8, scoped, tag = 'scoped memory for tpu_custom_call.1']
    #allocation5 [shape = 'u8[32768]{0}', space=vmem, size = 0x8000, scoped, tag = 'output window, operand 0']
    %6 = vsyncpa [#allocation4], 0
    %7 = vsyncpa [#allocation3], 0
    %s8 = scalar_lea.sflag [#allocation3], 1
    %9 = vsyncpa %s8, 0
    loop: start=0, step=1, limit=4
    $region2: #{tpu_custom_call.1} parent=1 // loop_pre_header
      _
    $region3: #{tpu_custom_call.1} parent=1 // loop_header
      %s11 = sphi 0, %s15
      %p12 = scmp.ge.s32.totalorder %s11, 4
      %s18 = sphi 0, %s30
      %s19 = sphi 0, %s26
      %s20 = sphi 0, %s18
      %s21 = sphi 0, %s19
      %s22 = sphi 0, %s20
      %s23 = sphi 0, %s21
      %s31 = sphi 0, %s31
      %s33 = sphi 0, %s31
      %s34 = sphi 0, %s33
      %s48 = sphi 0, %s34
      %s56 = sphi 0, %s58
      %s59 = sphi 0, %s56
      %s60 = sphi 0, %s59
      %s76 = sphi 0, %s60
    $region4: #{tpu_custom_call.1} parent=1 // loop_header_branch
      %14 = sbr.rel (%p12) target = $region8
    $region5: #{tpu_custom_call.1} parent=1 // loop_body
      %s16 = ssub.s32 %s11, 1
      %s17 = ssub.s32 %s11, 2
      %s24 = sadd.s32 1, %s19
      %p25 = scmp.ge.s32.totalorder %s24, 1
      %s26 = scalar_select %p25, 0, %s24
      %s27 = sadd.s32 1, %s18
      %s28 = scalar_select %p25, %s27, %s18
      %p29 = scmp.ge.s32.totalorder %s28, 2
      %s30 = scalar_select %p29, 0, %s28
      %s32 = sadd.s32 %s31, 1
      %p35 = scmp.eq.s32.totalorder %s11, 1
      %p36 = scmp.ne.s32.totalorder %s31, %s33
      %p37 = scmp.eq.s32.totalorder %s11, 0
      %p38 = por %p36, %p37
      %p39 = scmp.ne.s32.totalorder %s31, %s33
      %p40 = scmp.eq.s32.totalorder %s16, 1
      %p41 = por %p39, %p40
      %p42 = scmp.ne.s32.totalorder %s33, %s34
      %p43 = scmp.eq.s32.totalorder %s16, 0
      %p44 = por %p42, %p43
      %p45 = scmp.ne.s32.totalorder %s33, %s34
      %p46 = scmp.eq.s32.totalorder %s17, 1
      %p47 = por %p45, %p46
      %p49 = scmp.ne.s32.totalorder %s34, %s48
      %p50 = scmp.eq.s32.totalorder %s17, 0
      %p51 = por %p49, %p50
      %s52 = ssub.s32 %s18, %s30
      %s53 = ssub.s32 %s19, %s26
      %s54 = sor.u32 %s52, %s53
      %p55 = scmp.eq.s32.totalorder %s54, 0
      %s57 = sadd.s32 %s56, 1
      %s58 = scalar_select %p55, %s56, %s57
      %p61 = pneg %p55
      %p62 = scmp.eq.s32.totalorder %s11, 1
      %p63 = por %p61, %p62
      %p64 = scmp.ne.s32.totalorder %s56, %s59
      %p65 = scmp.eq.s32.totalorder %s11, 0
      %p66 = por %p64, %p65
      %p67 = scmp.ne.s32.totalorder %s56, %s59
      %p68 = scmp.eq.s32.totalorder %s16, 1
      %p69 = por %p67, %p68
      %p70 = scmp.ne.s32.totalorder %s59, %s60
      %p71 = scmp.eq.s32.totalorder %s16, 0
      %p72 = por %p70, %p71
      %p73 = scmp.ne.s32.totalorder %s59, %s60
      %p74 = scmp.eq.s32.totalorder %s17, 1
      %p75 = por %p73, %p74
      %p77 = scmp.ne.s32.totalorder %s60, %s76
      %p78 = scmp.eq.s32.totalorder %s17, 0
      %p79 = por %p77, %p78
      %p80 = scmp.le.s32.totalorder 1, %s11
      %p81 = scmp.lt.s32.totalorder %s11, 3
      %p82 = pnand %p80, %p81
      %p83 = pneg %p82
      // Predicated region
      $region9: #{tpu_custom_call.1} parent=5 // pred_check
        _
      $region10: #{tpu_custom_call.1} parent=5 // pred_check_branch
        %85 = sbr.rel (%p82) target = $region12
      $region11: #{tpu_custom_call.1} parent=5 // pred_region
        %s86 = ssub.s32 %s11, 1
        // Predicated region
        $region13: #{tpu_custom_call.1} parent=11 // pred_check
          %p87 = pneg %p44
        $region14: #{tpu_custom_call.1} parent=11 // pred_check_branch
          %89 = sbr.rel (%p87) target = $region16
        $region15: #{tpu_custom_call.1} parent=11 // pred_region
          %s91 = ssub.s32 32, 32
          %92 = vsyncadd [#allocation4], %s91
          %95 = dma.hbm_to_smem %s0, 32, [#allocation2], [#allocation4]
        $region16: #{tpu_custom_call.1} parent=11 // pred_fallthru
          _
      $region12: #{tpu_custom_call.1} parent=5 // pred_fallthru
        _
      %p96 = scmp.lt.s32.totalorder %s11, 2
      // Predicated region
      $region17: #{tpu_custom_call.1} parent=5 // pred_check
        %p97 = pneg %p96
      $region18: #{tpu_custom_call.1} parent=5 // pred_check_branch
        %99 = sbr.rel (%p97) target = $region20
      $region19: #{tpu_custom_call.1} parent=5 // pred_region
        _
      $region20: #{tpu_custom_call.1} parent=5 // pred_fallthru
        _
      %p100 = scmp.le.s32.totalorder 1, %s11
      %p101 = scmp.lt.s32.totalorder %s11, 3
      %p102 = pnand %p100, %p101
      %p103 = pneg %p102
      // Predicated region
      $region21: #{tpu_custom_call.1} parent=5 // pred_check
        _
      $region22: #{tpu_custom_call.1} parent=5 // pred_check_branch
        %105 = sbr.rel (%p102) target = $region24
      $region23: #{tpu_custom_call.1} parent=5 // pred_region
        %s106 = ssub.s32 %s11, 1
        // Predicated region
        $region25: #{tpu_custom_call.1} parent=23 // pred_check
          %p107 = pneg %p44
        $region26: #{tpu_custom_call.1} parent=23 // pred_check_branch
          %109 = sbr.rel (%p107) target = $region28
        $region27: #{tpu_custom_call.1} parent=23 // pred_region
          %110 = dma.done [#allocation4], 32
        $region28: #{tpu_custom_call.1} parent=23 // pred_fallthru
          _
        %111 = sfence
        %p112 = pneg %p44
        %p113 = pneg %p41
        %p114 = pneg %p72
        %p115 = pneg %p69
        %s116 = sand.u32 %s59, 1
        %s117 = scalar_lea.sflag [#allocation3], %s116
        %s118 = sand.u32 %s59, 1
        %s119 = smul.addr %s118, 32
        %s120 = scalar_lea.vmem [#allocation5], %s119
        %v121 = vlaneseq
        %v122 = vshrl.u32 %v121, 7
        %v123 = vlaneseq
        %v124 = vand.u32 %v123, 127
        %s125 = smul.u32 %s21, 1024
        %v126 = vmul.u32 %v122, 128
        %v127 = vstv %s125
        %v128 = vadd.s32 %v127, %v126
        %v129 = vadd.s32 %v128, %v124
        %v130 = vcvt.s32.f32 %v129
        %v131 = vadd.f32 %v130, 0.5
        %v132 = vmul.f32 %v131, 0.0625
        %v133 = vfloor.f32 %v132
        %v134 = vmul.f32 %v133, 16.0
        %v135 = vsub.f32 %v130, %v134
        %v136 = vsub.f32 15.0, %v135
        %v137 = vmul.f32 %v136, 2.0
        %v138 = vadd.f32 %v137, 1.0
        %v139 = vrcp.pop 16.0
        %v140 = vmul.f32 %v138, %v139
        %v141 = vsub.f32 %v140, 1.0
        %v142 = vsub.f32 15.0, %v133
        %v143 = vmul.f32 %v142, 2.0
        %v144 = vadd.f32 %v143, 1.0
        %v145 = vmul.f32 %v144, %v139
        %v146 = vsub.f32 %v145, 1.0
        %s147 = smul.u32 %s20, 84
        %s148 = sld [smem:[#allocation2 + %s147]]
        %s149 = sadd.s32 %s147, 1
        %s150 = sld [smem:[#allocation2 + %s149]]
        %s151 = sadd.s32 %s147, 2
        %s152 = sld [smem:[#allocation2 + %s151]]
        %v153 = vstv %s148
        %v154 = vmul.f32 %v153, %v141
        %v155 = vstv %s150
        %v156 = vmul.f32 %v155, %v146
        %v157 = vadd.f32 %v154, %v156
        %v158 = vstv %s152
        %v159 = vadd.f32 %v157, %v158
        %s160 = sadd.s32 %s147, 3
        %s161 = sld [smem:[#allocation2 + %s160]]
        %s162 = sadd.s32 %s147, 4
        %s163 = sld [smem:[#allocation2 + %s162]]
        %s164 = sadd.s32 %s147, 5
        %s165 = sld [smem:[#allocation2 + %s164]]
        %v166 = vstv %s161
        %v167 = vmul.f32 %v166, %v141
        %v168 = vstv %s163
        %v169 = vmul.f32 %v168, %v146
        %v170 = vadd.f32 %v167, %v169
        %v171 = vstv %s165
        %v172 = vadd.f32 %v170, %v171
        %s173 = sadd.s32 %s147, 6
        %s174 = sld [smem:[#allocation2 + %s173]]
        %s175 = sadd.s32 %s147, 7
        %s176 = sld [smem:[#allocation2 + %s175]]
        %s177 = sadd.s32 %s147, 8
        %s178 = sld [smem:[#allocation2 + %s177]]
        %v179 = vstv %s174
        %v180 = vmul.f32 %v179, %v141
        %v181 = vstv %s176
        %v182 = vmul.f32 %v181, %v146
        %v183 = vadd.f32 %v180, %v182
        %v184 = vstv %s178
        %v185 = vadd.f32 %v183, %v184
        %s186 = sadd.s32 %s147, 9
        %s187 = sld [smem:[#allocation2 + %s186]]
        %s188 = sadd.s32 %s147, 10
        %s189 = sld [smem:[#allocation2 + %s188]]
        %s190 = sadd.s32 %s147, 11
        %s191 = sld [smem:[#allocation2 + %s190]]
        %v192 = vstv %s187
        %v193 = vmul.f32 %v192, %v141
        %v194 = vstv %s189
        %v195 = vmul.f32 %v194, %v146
        %v196 = vadd.f32 %v193, %v195
        %v197 = vstv %s191
        %v198 = vadd.f32 %v196, %v197
        %vm199 = vcmp.gt.f32.partialorder %v159, 0.0
        %vm200 = vcmp.gt.f32.partialorder %v172, 0.0
        %vm201 = vmand %vm199, %vm200
        %vm202 = vcmp.gt.f32.partialorder %v185, 0.0
        %vm203 = vmand %vm201, %vm202
        %vm204 = vcmp.ge.f32.partialorder %v198, 0.0
        %vm205 = vmand %vm203, %vm204
        %vm206 = vcmp.lt.f32.partialorder %v198, 1e+10
        %vm207 = vmand %vm205, %vm206
        %v208 = vsel %vm207, %v198, 1e+10
        %s209 = sadd.s32 %s147, 12
        %s210 = sld [smem:[#allocation2 + %s209]]
        %s211 = sadd.s32 %s147, 13
        %s212 = sld [smem:[#allocation2 + %s211]]
        %s213 = sadd.s32 %s147, 14
        %s214 = sld [smem:[#allocation2 + %s213]]
        %v215 = vstv %s210
        %v216 = vmul.f32 %v215, %v141
        %v217 = vstv %s212
        %v218 = vmul.f32 %v217, %v146
        %v219 = vadd.f32 %v216, %v218
        %v220 = vstv %s214
        %v221 = vadd.f32 %v219, %v220
        %v222 = vsel %vm207, %v221, 0.0
        %s223 = sadd.s32 %s147, 15
        %s224 = sld [smem:[#allocation2 + %s223]]
        %s225 = sadd.s32 %s147, 16
        %s226 = sld [smem:[#allocation2 + %s225]]
        %s227 = sadd.s32 %s147, 17
        %s228 = sld [smem:[#allocation2 + %s227]]
        %v229 = vstv %s224
        %v230 = vmul.f32 %v229, %v141
        %v231 = vstv %s226
        %v232 = vmul.f32 %v231, %v146
        %v233 = vadd.f32 %v230, %v232
        %v234 = vstv %s228
        %v235 = vadd.f32 %v233, %v234
        %v236 = vsel %vm207, %v235, 0.0
        %s237 = sadd.s32 %s147, 18
        %s238 = sld [smem:[#allocation2 + %s237]]
        %s239 = sadd.s32 %s147, 19
        %s240 = sld [smem:[#allocation2 + %s239]]
        %s241 = sadd.s32 %s147, 20
        %s242 = sld [smem:[#allocation2 + %s241]]
        %v243 = vstv %s238
        %v244 = vmul.f32 %v243, %v141
        %v245 = vstv %s240
        %v246 = vmul.f32 %v245, %v146
        %v247 = vadd.f32 %v244, %v246
        %v248 = vstv %s242
        %v249 = vadd.f32 %v247, %v248
        %v250 = vsel %vm207, %v249, 0.0
        %s251 = sadd.s32 %s147, 21
        %s252 = sld [smem:[#allocation2 + %s251]]
        %s253 = sadd.s32 %s147, 22
        %s254 = sld [smem:[#allocation2 + %s253]]
        %s255 = sadd.s32 %s147, 23
        %s256 = sld [smem:[#allocation2 + %s255]]
        %v257 = vstv %s252
        %v258 = vmul.f32 %v257, %v141
        %v259 = vstv %s254
        %v260 = vmul.f32 %v259, %v146
        %v261 = vadd.f32 %v258, %v260
        %v262 = vstv %s256
        %v263 = vadd.f32 %v261, %v262
        %s264 = sadd.s32 %s147, 24
        %s265 = sld [smem:[#allocation2 + %s264]]
        %s266 = sadd.s32 %s147, 25
        %s267 = sld [smem:[#allocation2 + %s266]]
        %s268 = sadd.s32 %s147, 26
        %s269 = sld [smem:[#allocation2 + %s268]]
        %v270 = vstv %s265
        %v271 = vmul.f32 %v270, %v141
        %v272 = vstv %s267
        %v273 = vmul.f32 %v272, %v146
        %v274 = vadd.f32 %v271, %v273
        %v275 = vstv %s269
        %v276 = vadd.f32 %v274, %v275
        %s277 = sadd.s32 %s147, 27
        %s278 = sld [smem:[#allocation2 + %s277]]
        %s279 = sadd.s32 %s147, 28
        %s280 = sld [smem:[#allocation2 + %s279]]
        %s281 = sadd.s32 %s147, 29
        %s282 = sld [smem:[#allocation2 + %s281]]
        %v283 = vstv %s278
        %v284 = vmul.f32 %v283, %v141
        %v285 = vstv %s280
        %v286 = vmul.f32 %v285, %v146
        %v287 = vadd.f32 %v284, %v286
        %v288 = vstv %s282
        %v289 = vadd.f32 %v287, %v288
        %s290 = sadd.s32 %s147, 30
        %s291 = sld [smem:[#allocation2 + %s290]]
        %s292 = sadd.s32 %s147, 31
        %s293 = sld [smem:[#allocation2 + %s292]]
        %s294 = sadd.s32 %s147, 32
        %s295 = sld [smem:[#allocation2 + %s294]]
        %v296 = vstv %s291
        %v297 = vmul.f32 %v296, %v141
        %v298 = vstv %s293
        %v299 = vmul.f32 %v298, %v146
        %v300 = vadd.f32 %v297, %v299
        %v301 = vstv %s295
        %v302 = vadd.f32 %v300, %v301
        %vm303 = vcmp.gt.f32.partialorder %v263, 0.0
        %vm304 = vcmp.gt.f32.partialorder %v276, 0.0
        %vm305 = vmand %vm303, %vm304
        %vm306 = vcmp.gt.f32.partialorder %v289, 0.0
        %vm307 = vmand %vm305, %vm306
        %vm308 = vcmp.ge.f32.partialorder %v302, 0.0
        %vm309 = vmand %vm307, %vm308
        %vm310 = vcmp.lt.f32.partialorder %v302, %v208
        %vm311 = vmand %vm309, %vm310
        %v312 = vsel %vm311, %v302, %v208
        %s313 = sadd.s32 %s147, 33
        %s314 = sld [smem:[#allocation2 + %s313]]
        %s315 = sadd.s32 %s147, 34
        %s316 = sld [smem:[#allocation2 + %s315]]
        %s317 = sadd.s32 %s147, 35
        %s318 = sld [smem:[#allocation2 + %s317]]
        %v319 = vstv %s314
        %v320 = vmul.f32 %v319, %v141
        %v321 = vstv %s316
        %v322 = vmul.f32 %v321, %v146
        %v323 = vadd.f32 %v320, %v322
        %v324 = vstv %s318
        %v325 = vadd.f32 %v323, %v324
        %v326 = vsel %vm311, %v325, %v222
        %s327 = sadd.s32 %s147, 36
        %s328 = sld [smem:[#allocation2 + %s327]]
        %s329 = sadd.s32 %s147, 37
        %s330 = sld [smem:[#allocation2 + %s329]]
        %s331 = sadd.s32 %s147, 38
        %s332 = sld [smem:[#allocation2 + %s331]]
        %v333 = vstv %s328
        %v334 = vmul.f32 %v333, %v141
        %v335 = vstv %s330
        %v336 = vmul.f32 %v335, %v146
        %v337 = vadd.f32 %v334, %v336
        %v338 = vstv %s332
        %v339 = vadd.f32 %v337, %v338
        %v340 = vsel %vm311, %v339, %v236
        %s341 = sadd.s32 %s147, 39
        %s342 = sld [smem:[#allocation2 + %s341]]
        %s343 = sadd.s32 %s147, 40
        %s344 = sld [smem:[#allocation2 + %s343]]
        %s345 = sadd.s32 %s147, 41
        %s346 = sld [smem:[#allocation2 + %s345]]
        %v347 = vstv %s342
        %v348 = vmul.f32 %v347, %v141
        %v349 = vstv %s344
        %v350 = vmul.f32 %v349, %v146
        %v351 = vadd.f32 %v348, %v350
        %v352 = vstv %s346
        %v353 = vadd.f32 %v351, %v352
        %v354 = vsel %vm311, %v353, %v250
        %s355 = sadd.s32 %s147, 42
        %s356 = sld [smem:[#allocation2 + %s355]]
        %s357 = sadd.s32 %s147, 43
        %s358 = sld [smem:[#allocation2 + %s357]]
        %s359 = sadd.s32 %s147, 44
        %s360 = sld [smem:[#allocation2 + %s359]]
        %v361 = vstv %s356
        %v362 = vmul.f32 %v361, %v141
        %v363 = vstv %s358
        %v364 = vmul.f32 %v363, %v146
        %v365 = vadd.f32 %v362, %v364
        %v366 = vstv %s360
        %v367 = vadd.f32 %v365, %v366
        %s368 = sadd.s32 %s147, 45
        %s369 = sld [smem:[#allocation2 + %s368]]
        %s370 = sadd.s32 %s147, 46
        %s371 = sld [smem:[#allocation2 + %s370]]
        %s372 = sadd.s32 %s147, 47
        %s373 = sld [smem:[#allocation2 + %s372]]
        %v374 = vstv %s369
        %v375 = vmul.f32 %v374, %v141
        %v376 = vstv %s371
        %v377 = vmul.f32 %v376, %v146
        %v378 = vadd.f32 %v375, %v377
        %v379 = vstv %s373
        %v380 = vadd.f32 %v378, %v379
        %s381 = sadd.s32 %s147, 48
        %s382 = sld [smem:[#allocation2 + %s381]]
        %s383 = sadd.s32 %s147, 49
        %s384 = sld [smem:[#allocation2 + %s383]]
        %s385 = sadd.s32 %s147, 50
        %s386 = sld [smem:[#allocation2 + %s385]]
        %v387 = vstv %s382
        %v388 = vmul.f32 %v387, %v141
        %v389 = vstv %s384
        %v390 = vmul.f32 %v389, %v146
        %v391 = vadd.f32 %v388, %v390
        %v392 = vstv %s386
        %v393 = vadd.f32 %v391, %v392
        %s394 = sadd.s32 %s147, 51
        %s395 = sld [smem:[#allocation2 + %s394]]
        %s396 = sadd.s32 %s147, 52
        %s397 = sld [smem:[#allocation2 + %s396]]
        %s398 = sadd.s32 %s147, 53
        %s399 = sld [smem:[#allocation2 + %s398]]
        %v400 = vstv %s395
        %v401 = vmul.f32 %v400, %v141
        %v402 = vstv %s397
        %v403 = vmul.f32 %v402, %v146
        %v404 = vadd.f32 %v401, %v403
        %v405 = vstv %s399
        %v406 = vadd.f32 %v404, %v405
        %vm407 = vcmp.gt.f32.partialorder %v367, 0.0
        %vm408 = vcmp.gt.f32.partialorder %v380, 0.0
        %vm409 = vmand %vm407, %vm408
        %vm410 = vcmp.gt.f32.partialorder %v393, 0.0
        %vm411 = vmand %vm409, %vm410
        %vm412 = vcmp.ge.f32.partialorder %v406, 0.0
        %vm413 = vmand %vm411, %vm412
        %vm414 = vcmp.lt.f32.partialorder %v406, %v312
        %vm415 = vmand %vm413, %vm414
        %v416 = vsel %vm415, %v406, %v312
        %s417 = sadd.s32 %s147, 54
        %s418 = sld [smem:[#allocation2 + %s417]]
        %s419 = sadd.s32 %s147, 55
        %s420 = sld [smem:[#allocation2 + %s419]]
        %s421 = sadd.s32 %s147, 56
        %s422 = sld [smem:[#allocation2 + %s421]]
        %v423 = vstv %s418
        %v424 = vmul.f32 %v423, %v141
        %v425 = vstv %s420
        %v426 = vmul.f32 %v425, %v146
        %v427 = vadd.f32 %v424, %v426
        %v428 = vstv %s422
        %v429 = vadd.f32 %v427, %v428
        %v430 = vsel %vm415, %v429, %v326
        %s431 = sadd.s32 %s147, 57
        %s432 = sld [smem:[#allocation2 + %s431]]
        %s433 = sadd.s32 %s147, 58
        %s434 = sld [smem:[#allocation2 + %s433]]
        %s435 = sadd.s32 %s147, 59
        %s436 = sld [smem:[#allocation2 + %s435]]
        %v437 = vstv %s432
        %v438 = vmul.f32 %v437, %v141
        %v439 = vstv %s434
        %v440 = vmul.f32 %v439, %v146
        %v441 = vadd.f32 %v438, %v440
        %v442 = vstv %s436
        %v443 = vadd.f32 %v441, %v442
        %v444 = vsel %vm415, %v443, %v340
        %s445 = sadd.s32 %s147, 60
        %s446 = sld [smem:[#allocation2 + %s445]]
        %s447 = sadd.s32 %s147, 61
        %s448 = sld [smem:[#allocation2 + %s447]]
        %s449 = sadd.s32 %s147, 62
        %s450 = sld [smem:[#allocation2 + %s449]]
        %v451 = vstv %s446
        %v452 = vmul.f32 %v451, %v141
        %v453 = vstv %s448
        %v454 = vmul.f32 %v453, %v146
        %v455 = vadd.f32 %v452, %v454
        %v456 = vstv %s450
        %v457 = vadd.f32 %v455, %v456
        %v458 = vsel %vm415, %v457, %v354
        %s459 = sadd.s32 %s147, 63
        %s460 = sld [smem:[#allocation2 + %s459]]
        %s461 = sadd.s32 %s147, 64
        %s462 = sld [smem:[#allocation2 + %s461]]
        %s463 = sadd.s32 %s147, 65
        %s464 = sld [smem:[#allocation2 + %s463]]
        %v465 = vstv %s460
        %v466 = vmul.f32 %v465, %v141
        %v467 = vstv %s462
        %v468 = vmul.f32 %v467, %v146
        %v469 = vadd.f32 %v466, %v468
        %v470 = vstv %s464
        %v471 = vadd.f32 %v469, %v470
        %s472 = sadd.s32 %s147, 66
        %s473 = sld [smem:[#allocation2 + %s472]]
        %s474 = sadd.s32 %s147, 67
        %s475 = sld [smem:[#allocation2 + %s474]]
        %s476 = sadd.s32 %s147, 68
        %s477 = sld [smem:[#allocation2 + %s476]]
        %v478 = vstv %s473
        %v479 = vmul.f32 %v478, %v141
        %v480 = vstv %s475
        %v481 = vmul.f32 %v480, %v146
        %v482 = vadd.f32 %v479, %v481
        %v483 = vstv %s477
        %v484 = vadd.f32 %v482, %v483
        %s485 = sadd.s32 %s147, 69
        %s486 = sld [smem:[#allocation2 + %s485]]
        %s487 = sadd.s32 %s147, 70
        %s488 = sld [smem:[#allocation2 + %s487]]
        %s489 = sadd.s32 %s147, 71
        %s490 = sld [smem:[#allocation2 + %s489]]
        %v491 = vstv %s486
        %v492 = vmul.f32 %v491, %v141
        %v493 = vstv %s488
        %v494 = vmul.f32 %v493, %v146
        %v495 = vadd.f32 %v492, %v494
        %v496 = vstv %s490
        %v497 = vadd.f32 %v495, %v496
        %s498 = sadd.s32 %s147, 72
        %s499 = sld [smem:[#allocation2 + %s498]]
        %s500 = sadd.s32 %s147, 73
        %s501 = sld [smem:[#allocation2 + %s500]]
        %s502 = sadd.s32 %s147, 74
        %s503 = sld [smem:[#allocation2 + %s502]]
        %v504 = vstv %s499
        %v505 = vmul.f32 %v504, %v141
        %v506 = vstv %s501
        %v507 = vmul.f32 %v506, %v146
        %v508 = vadd.f32 %v505, %v507
        %v509 = vstv %s503
        %v510 = vadd.f32 %v508, %v509
        %vm511 = vcmp.gt.f32.partialorder %v471, 0.0
        %vm512 = vcmp.gt.f32.partialorder %v484, 0.0
        %vm513 = vmand %vm511, %vm512
        %vm514 = vcmp.gt.f32.partialorder %v497, 0.0
        %vm515 = vmand %vm513, %vm514
        %vm516 = vcmp.ge.f32.partialorder %v510, 0.0
        %vm517 = vmand %vm515, %vm516
        %vm518 = vcmp.lt.f32.partialorder %v510, %v416
        %vm519 = vmand %vm517, %vm518
        %v520 = vsel %vm519, %v510, %v416
        %s521 = sadd.s32 %s147, 75
        %s522 = sld [smem:[#allocation2 + %s521]]
        %s523 = sadd.s32 %s147, 76
        %s524 = sld [smem:[#allocation2 + %s523]]
        %s525 = sadd.s32 %s147, 77
        %s526 = sld [smem:[#allocation2 + %s525]]
        %v527 = vstv %s522
        %v528 = vmul.f32 %v527, %v141
        %v529 = vstv %s524
        %v530 = vmul.f32 %v529, %v146
        %v531 = vadd.f32 %v528, %v530
        %v532 = vstv %s526
        %v533 = vadd.f32 %v531, %v532
        %v534 = vsel %vm519, %v533, %v430
        %s535 = sadd.s32 %s147, 78
        %s536 = sld [smem:[#allocation2 + %s535]]
        %s537 = sadd.s32 %s147, 79
        %s538 = sld [smem:[#allocation2 + %s537]]
        %s539 = sadd.s32 %s147, 80
        %s540 = sld [smem:[#allocation2 + %s539]]
        %v541 = vstv %s536
        %v542 = vmul.f32 %v541, %v141
        %v543 = vstv %s538
        %v544 = vmul.f32 %v543, %v146
        %v545 = vadd.f32 %v542, %v544
        %v546 = vstv %s540
        %v547 = vadd.f32 %v545, %v546
        %v548 = vsel %vm519, %v547, %v444
        %s549 = sadd.s32 %s147, 81
        %s550 = sld [smem:[#allocation2 + %s549]]
        %s551 = sadd.s32 %s147, 82
        %s552 = sld [smem:[#allocation2 + %s551]]
        %s553 = sadd.s32 %s147, 83
        %s554 = sld [smem:[#allocation2 + %s553]]
        %v555 = vstv %s550
        %v556 = vmul.f32 %v555, %v141
        %v557 = vstv %s552
        %v558 = vmul.f32 %v557, %v146
        %v559 = vadd.f32 %v556, %v558
        %v560 = vstv %s554
        %v561 = vadd.f32 %v559, %v560
        %v562 = vsel %vm519, %v561, %v458
        %563 = vst [vmem:[%s120] sm:$0xff] %v534
        %s564 = scalar_lea.vmem %s120, 8 [#allocation5]
        %565 = vst [vmem:[%s564] sm:$0xff] %v548
        %s566 = scalar_lea.vmem %s120, 16 [#allocation5]
        %567 = vst [vmem:[%s566] sm:$0xff] %v562
        %vm568 = vcmp.lt.f32.partialorder %v520, 1e+10
        %v569 = vsel %vm568, 1.0, 0.0
        %s570 = scalar_lea.vmem %s120, 24 [#allocation5]
        %571 = vst [vmem:[%s570] sm:$0xff] %v569
        %s572 = sand.u32 %s59, 1
        %s573 = scalar_lea.sflag [#allocation3], %s572
        %s574 = sand.u32 %s59, 1
        %s575 = smul.addr %s574, 32
        %s576 = scalar_lea.vmem [#allocation5], %s575
        // Predicated region
        $region29: #{tpu_custom_call.1} parent=23 // pred_check
          %p577 = pneg %p69
        $region30: #{tpu_custom_call.1} parent=23 // pred_check_branch
          %579 = sbr.rel (%p577) target = $region32
        $region31: #{tpu_custom_call.1} parent=23 // pred_region
          %s581 = ssub.s32 512, 512
          %582 = vsyncadd %s573, %s581
          %s583 = smul.addr %s20, 4
          %s584 = sadd.s32 %s21, %s583
          %s585 = smul.addr %s584, 128
          %s586 = scalar_lea.hbm %s1, %s585
          %s587 = sshll.u32 %s576, 4
          %s588 = int_to_ptr.vmem [resolvable:$true] %s587
          %593 = dma.vmem_to_hbm [thread:$0]  %s588, 512, %s586, %s573, 128, 128, 8
        $region32: #{tpu_custom_call.1} parent=23 // pred_fallthru
          _
      $region24: #{tpu_custom_call.1} parent=5 // pred_fallthru
        _
      %p594 = scmp.le.s32.totalorder 2, %s11
      // Predicated region
      $region33: #{tpu_custom_call.1} parent=5 // pred_check
        %p595 = pneg %p594
      $region34: #{tpu_custom_call.1} parent=5 // pred_check_branch
        %597 = sbr.rel (%p595) target = $region36
      $region35: #{tpu_custom_call.1} parent=5 // pred_region
        %s598 = ssub.s32 %s11, 2
        // Predicated region
        $region37: #{tpu_custom_call.1} parent=35 // pred_check
          %p599 = pneg %p75
        $region38: #{tpu_custom_call.1} parent=35 // pred_check_branch
          %601 = sbr.rel (%p599) target = $region40
        $region39: #{tpu_custom_call.1} parent=35 // pred_region
          %s602 = sand.u32 %s60, 1
          %s603 = scalar_lea.sflag [#allocation3], %s602
          %s604 = sand.u32 %s60, 1
          %s605 = smul.addr %s604, 32
          %s606 = scalar_lea.vmem [#allocation5], %s605
          %607 = dma.done %s603, 512
        $region40: #{tpu_custom_call.1} parent=35 // pred_fallthru
          _
      $region36: #{tpu_custom_call.1} parent=5 // pred_fallthru
        _
    $region6: #{tpu_custom_call.1} parent=1 // loop_footer
      %s15 = sadd.s32 1, %s11
    $region7: #{tpu_custom_call.1} parent=1 // loop_footer_branch
      %10 = sbr.rel target = $region3
    $region8: #{tpu_custom_call.1} parent=1 // loop_exit
      _
    %608 = vsyncpa [#allocation3], 1
    %s609 = scalar_lea.sflag [#allocation3], 1
    %610 = vsyncpa %s609, 1
    %611 = vsyncpa [#allocation4], 1
    %s612 = scalar_lea.sflag [#allocation4], 1
    %613 = vsyncpa %s612, 1

</llo_original>
